<compile_context>
chip_gen: v7x
topology: tpu7x:2x2x1
jax: 0.10.0
libtpu: 0.0.40
codegen_flags: <defaults>
</compile_context>

<pallas_src>
import jax
import jax.numpy as jnp
import numpy as np
from jax import lax
from jax.experimental import pallas as pl
from jax.experimental.pallas import tpu as pltpu


def non_bt_forward(x, w1, gamma1, beta1, w2, gamma2, beta2, eps=1e-5):
    """Forward pass of non_bt (stride=1, dilation=1, 3x3, in_ch == out_ch)."""
    N, C, H, W = x.shape
    Cout = w1.shape[0]
    if Cout != C:
        raise ValueError("non_bt residual add requires in_channels == out_channels")

    f32 = jnp.float32
    Wp = W + 2                    # padded row width
    Hf = H * Wp                   # flat length of one (H, W+2) output slab
    Lp = (H + 3) * Wp             # flat length of the padded input slab
    offs = [kh * Wp + kw for kh in range(3) for kw in range(3)]

    # ---- wrapper-side layout plumbing (single pad + reshape, read-once) ----
    # rows: 1 zero row on top, 2 at the bottom (keeps every shifted slab of
    # length Hf in-bounds); cols: 1 zero on each side.
    xpf = jnp.pad(x, ((0, 0), (0, 0), (1, 2), (1, 1))).reshape(N, C, Lp)
    w1m = jnp.transpose(w1, (2, 3, 0, 1)).reshape(9, Cout, C).astype(f32)
    w2m = jnp.transpose(w2, (2, 3, 0, 1)).reshape(9, Cout, C).astype(f32)
    # mask of the valid (non-junk) columns of a flat (H, W+2) slab
    mask = (jnp.arange(Hf, dtype=jnp.int32) % Wp < W).astype(f32).reshape(1, Hf)

    def _conv(load_slab, w_ref):
        # 3x3 conv as 9 accumulated matmuls over lane-shifted slabs.
        acc = jnp.zeros((Cout, Hf), f32)
        for k, off in enumerate(offs):
            acc = acc + jnp.dot(w_ref[k], load_slab(off),
                                preferred_element_type=f32)
        return acc

    # ---- pass 1: BN1 batch statistics (stats only; no big HBM output) ----
    def stats1_kernel(xpf_ref, w1_ref, mask_ref, ssum_ref, ssq_ref):
        y1 = _conv(lambda off: xpf_ref[0, :, off:off + Hf], w1_ref)
        m = mask_ref[...]
        y1m = y1 * m
        ssum_ref[0] = jnp.sum(y1m, axis=1, keepdims=True)
        ssq_ref[0] = jnp.sum(y1m * y1, axis=1, keepdims=True)

    # ---- pass 2: BN2 batch statistics (recompute conv1, fused bn1+relu, conv2) ----
    def stats2_kernel(xpf_ref, w1_ref, w2_ref, mask_ref, s1_ref, b1_ref,
                      ssum_ref, ssq_ref, apad_ref):
        m = mask_ref[...]
        y1 = _conv(lambda off: xpf_ref[0, :, off:off + Hf], w1_ref)
        a1 = jnp.maximum(y1 * s1_ref[...] + b1_ref[...], 0.0) * m
        # only head/tail of the padded scratch need explicit zeros; the masked
        # junk columns of a1 land exactly on the interior pad border.
        apad_ref[:, :W + 3] = jnp.zeros((Cout, W + 3), f32)
        apad_ref[:, W + 3 + Hf:] = jnp.zeros((Cout, Lp - W - 3 - Hf), f32)
        apad_ref[:, W + 3:W + 3 + Hf] = a1
        y2 = _conv(lambda off: apad_ref[:, off:off + Hf], w2_ref)
        y2m = y2 * m
        ssum_ref[0] = jnp.sum(y2m, axis=1, keepdims=True)
        ssq_ref[0] = jnp.sum(y2m * y2, axis=1, keepdims=True)

    # ---- pass 3: fully fused conv1 -> bn1+relu -> conv2 -> bn2 + residual + relu ----
    def final_kernel(xpf_ref, w1_ref, w2_ref, mask_ref, s1_ref, b1_ref,
                     s2_ref, b2_ref, o_ref, apad_ref):
        m = mask_ref[...]
        y1 = _conv(lambda off: xpf_ref[0, :, off:off + Hf], w1_ref)
        a1 = jnp.maximum(y1 * s1_ref[...] + b1_ref[...], 0.0) * m
        apad_ref[:, :W + 3] = jnp.zeros((Cout, W + 3), f32)
        apad_ref[:, W + 3 + Hf:] = jnp.zeros((Cout, Lp - W - 3 - Hf), f32)
        apad_ref[:, W + 3:W + 3 + Hf] = a1
        y2 = _conv(lambda off: apad_ref[:, off:off + Hf], w2_ref)
        xres = xpf_ref[0, :, W + 3:W + 3 + Hf]        # residual (junk cols irrelevant)
        o_ref[0] = jnp.maximum(y2 * s2_ref[...] + b2_ref[...] + xres,
                               0.0).astype(o_ref.dtype)

    xpf_spec = pl.BlockSpec((1, C, Lp), lambda b: (b, 0, 0))
    w_spec = pl.BlockSpec((9, Cout, C), lambda b: (0, 0, 0))
    mask_spec = pl.BlockSpec((1, Hf), lambda b: (0, 0))
    vec_spec = pl.BlockSpec((Cout, 1), lambda b: (0, 0))
    part_spec = pl.BlockSpec((1, Cout, 1), lambda b: (b, 0, 0))
    part_shape = jax.ShapeDtypeStruct((N, Cout, 1), f32)
    parallel = pltpu.CompilerParams(dimension_semantics=("parallel",))

    cnt = jnp.asarray(N * H * W, f32)

    def _fold_bn(ssum, ssq, gamma, beta):
        mean = jnp.sum(ssum, axis=0) / cnt                       # (Cout, 1)
        # E[x^2] - mean^2 in f32; clamp to avoid tiny negative values from
        # cancellation.  TODO(synk): use centered / compensated accumulation
        # for very large activation magnitudes.
        var = jnp.maximum(jnp.sum(ssq, axis=0) / cnt - mean * mean, 0.0)
        scale = gamma.reshape(-1, 1).astype(f32) / jnp.sqrt(var + eps)
        shift = beta.reshape(-1, 1).astype(f32) - mean * scale
        return scale, shift

    ssum1, ssq1 = pl.pallas_call(
        stats1_kernel,
        out_shape=(part_shape, part_shape),
        grid=(N,),
        in_specs=[xpf_spec, w_spec, mask_spec],
        out_specs=(part_spec, part_spec),
        compiler_params=parallel,
    )(xpf, w1m, mask)
    s1, sh1 = _fold_bn(ssum1, ssq1, gamma1, beta1)

    ssum2, ssq2 = pl.pallas_call(
        stats2_kernel,
        out_shape=(part_shape, part_shape),
        grid=(N,),
        in_specs=[xpf_spec, w_spec, w_spec, mask_spec, vec_spec, vec_spec],
        out_specs=(part_spec, part_spec),
        scratch_shapes=[pltpu.VMEM((Cout, Lp), f32)],
        compiler_params=parallel,
    )(xpf, w1m, w2m, mask, s1, sh1)
    s2, sh2 = _fold_bn(ssum2, ssq2, gamma2, beta2)

    out_flat = pl.pallas_call(
        final_kernel,
        out_shape=jax.ShapeDtypeStruct((N, Cout, Hf), x.dtype),
        grid=(N,),
        in_specs=[xpf_spec, w_spec, w_spec, mask_spec,
                  vec_spec, vec_spec, vec_spec, vec_spec],
        out_specs=pl.BlockSpec((1, Cout, Hf), lambda b: (b, 0, 0)),
        scratch_shapes=[pltpu.VMEM((Cout, Lp), f32)],
        compiler_params=parallel,
    )(xpf, w1m, w2m, mask, s1, sh1, s2, sh2)

    # TODO(synk): for large spatial extents, tile the flat spatial axis into
    # row groups (with a 2-row halo) so per-program blocks fit v7x's 64 MiB VMEM.
    return out_flat.reshape(N, Cout, H, Wp)[:, :, :, :W]


def non_bt_reference(x, w1, gamma1, beta1, w2, gamma2, beta2, eps=1e-5):
    def conv(v, w):
        return lax.conv_general_dilated(
            v, w, window_strides=(1, 1), padding=((1, 1), (1, 1)),
            dimension_numbers=('NCHW', 'OIHW', 'NCHW'))

    def bn(v, g, b):
        mean = v.mean(axis=(0, 2, 3), keepdims=True)
        var = v.var(axis=(0, 2, 3), keepdims=True)
        vn = (v - mean) / jnp.sqrt(var + eps)
        return vn * g.reshape(1, -1, 1, 1) + b.reshape(1, -1, 1, 1)

    a = jnp.maximum(bn(conv(x, w1), gamma1, beta1), 0.0)
    y = bn(conv(a, w2), gamma2, beta2)
    return jnp.maximum(y + x, 0.0)


if __name__ == "__main__":
    # small shapes: batch=2, channels=4 (in == out), spatial=16
    N, C, H, W = 2, 4, 16, 16
    key = jax.random.PRNGKey(0)
    kx, kw1, kg1, kb1, kw2, kg2, kb2 = jax.random.split(key, 7)

    x = jax.random.normal(kx, (N, C, H, W), dtype=jnp.float32)
    w1 = 0.1 * jax.random.normal(kw1, (C, C, 3, 3), dtype=jnp.float32)
    w2 = 0.1 * jax.random.normal(kw2, (C, C, 3, 3), dtype=jnp.float32)
    gamma1 = 1.0 + 0.1 * jax.random.normal(kg1, (C,), dtype=jnp.float32)
    beta1 = 0.1 * jax.random.normal(kb1, (C,), dtype=jnp.float32)
    gamma2 = 1.0 + 0.1 * jax.random.normal(kg2, (C,), dtype=jnp.float32)
    beta2 = 0.1 * jax.random.normal(kb2, (C,), dtype=jnp.float32)

    out = jax.block_until_ready(
        non_bt_forward(x, w1, gamma1, beta1, w2, gamma2, beta2))
    ref = jax.block_until_ready(
        non_bt_reference(x, w1, gamma1, beta1, w2, gamma2, beta2))

    np.testing.assert_allclose(np.asarray(out), np.asarray(ref),
                               rtol=5e-4, atol=5e-4)
    print("KERNEL_OK")
</pallas_src>

<mosaic_0001>
module attributes {stable_mosaic.version = 11 : i64} {
  func.func @stats1_kernel(%arg0: i32, %arg1: memref<1x4x342xf32, #tpu.memory_space<vmem>>, %arg2: memref<9x4x4xf32, #tpu.memory_space<vmem>>, %arg3: memref<1x288xf32, #tpu.memory_space<vmem>>, %arg4: memref<1x4x1xf32, #tpu.memory_space<vmem>>, %arg5: memref<1x4x1xf32, #tpu.memory_space<vmem>>) attributes {dimension_semantics = [#tpu.dimension_semantics<parallel>], iteration_bounds = array<i64: 2>, scalar_prefetch = 0 : i64, scratch_operands = 0 : i64, tpu.core_type = #tpu.core_type<tc>, window_params = [{transform_indices = @transform_0, window_bounds = array<i64: 1, 4, 342>}, {pipeline_mode = #tpu.pipeline_mode<synchronous>, transform_indices = @transform_1, window_bounds = array<i64: 9, 4, 4>}, {pipeline_mode = #tpu.pipeline_mode<synchronous>, transform_indices = @transform_2, window_bounds = array<i64: 1, 288>}, {transform_indices = @transform_3, window_bounds = array<i64: 1, 4, 1>}, {transform_indices = @transform_4, window_bounds = array<i64: 1, 4, 1>}]} {
    %cst = arith.constant 0.000000e+00 : f32
    %0 = vector.broadcast %cst : f32 to vector<4x288xf32>
    %c0 = arith.constant 0 : index
    %c0_0 = arith.constant 0 : index
    %c0_1 = arith.constant 0 : index
    %1 = vector.load %arg2[%c0, %c0_0, %c0_1] : memref<9x4x4xf32, #tpu.memory_space<vmem>>, vector<1x4x4xf32>
    %2 = vector.shape_cast %1 : vector<1x4x4xf32> to vector<4x4xf32>
    %c0_2 = arith.constant 0 : index
    %c0_3 = arith.constant 0 : index
    %c0_4 = arith.constant 0 : index
    %3 = vector.load %arg1[%c0_2, %c0_3, %c0_4] : memref<1x4x342xf32, #tpu.memory_space<vmem>>, vector<1x4x288xf32>
    %4 = vector.shape_cast %3 : vector<1x4x288xf32> to vector<4x288xf32>
    %cst_5 = arith.constant dense<0.000000e+00> : vector<4x288xf32>
    %5 = tpu.matmul %2, %4, %cst_5 {dimension_numbers = #tpu.dot_dimension_numbers<[1], [0], [0], [1], [0, 0, 1, 1], [], []>} : vector<4x4xf32>, vector<4x288xf32>, vector<4x288xf32> -> vector<4x288xf32>
    %6 = arith.addf %0, %5 : vector<4x288xf32>
    %c1 = arith.constant 1 : index
    %c0_6 = arith.constant 0 : index
    %c0_7 = arith.constant 0 : index
    %7 = vector.load %arg2[%c1, %c0_6, %c0_7] : memref<9x4x4xf32, #tpu.memory_space<vmem>>, vector<1x4x4xf32>
    %8 = vector.shape_cast %7 : vector<1x4x4xf32> to vector<4x4xf32>
    %c0_8 = arith.constant 0 : index
    %c0_9 = arith.constant 0 : index
    %c1_10 = arith.constant 1 : index
    %9 = vector.load %arg1[%c0_8, %c0_9, %c1_10] : memref<1x4x342xf32, #tpu.memory_space<vmem>>, vector<1x4x288xf32>
    %10 = vector.shape_cast %9 : vector<1x4x288xf32> to vector<4x288xf32>
    %cst_11 = arith.constant dense<0.000000e+00> : vector<4x288xf32>
    %11 = tpu.matmul %8, %10, %cst_11 {dimension_numbers = #tpu.dot_dimension_numbers<[1], [0], [0], [1], [0, 0, 1, 1], [], []>} : vector<4x4xf32>, vector<4x288xf32>, vector<4x288xf32> -> vector<4x288xf32>
    %12 = arith.addf %6, %11 : vector<4x288xf32>
    %c2 = arith.constant 2 : index
    %c0_12 = arith.constant 0 : index
    %c0_13 = arith.constant 0 : index
    %13 = vector.load %arg2[%c2, %c0_12, %c0_13] : memref<9x4x4xf32, #tpu.memory_space<vmem>>, vector<1x4x4xf32>
    %14 = vector.shape_cast %13 : vector<1x4x4xf32> to vector<4x4xf32>
    %c0_14 = arith.constant 0 : index
    %c0_15 = arith.constant 0 : index
    %c2_16 = arith.constant 2 : index
    %15 = vector.load %arg1[%c0_14, %c0_15, %c2_16] : memref<1x4x342xf32, #tpu.memory_space<vmem>>, vector<1x4x288xf32>
    %16 = vector.shape_cast %15 : vector<1x4x288xf32> to vector<4x288xf32>
    %cst_17 = arith.constant dense<0.000000e+00> : vector<4x288xf32>
    %17 = tpu.matmul %14, %16, %cst_17 {dimension_numbers = #tpu.dot_dimension_numbers<[1], [0], [0], [1], [0, 0, 1, 1], [], []>} : vector<4x4xf32>, vector<4x288xf32>, vector<4x288xf32> -> vector<4x288xf32>
    %18 = arith.addf %12, %17 : vector<4x288xf32>
    %c3 = arith.constant 3 : index
    %c0_18 = arith.constant 0 : index
    %c0_19 = arith.constant 0 : index
    %19 = vector.load %arg2[%c3, %c0_18, %c0_19] : memref<9x4x4xf32, #tpu.memory_space<vmem>>, vector<1x4x4xf32>
    %20 = vector.shape_cast %19 : vector<1x4x4xf32> to vector<4x4xf32>
    %c0_20 = arith.constant 0 : index
    %c0_21 = arith.constant 0 : index
    %c18 = arith.constant 18 : index
    %21 = vector.load %arg1[%c0_20, %c0_21, %c18] : memref<1x4x342xf32, #tpu.memory_space<vmem>>, vector<1x4x288xf32>
    %22 = vector.shape_cast %21 : vector<1x4x288xf32> to vector<4x288xf32>
    %cst_22 = arith.constant dense<0.000000e+00> : vector<4x288xf32>
    %23 = tpu.matmul %20, %22, %cst_22 {dimension_numbers = #tpu.dot_dimension_numbers<[1], [0], [0], [1], [0, 0, 1, 1], [], []>} : vector<4x4xf32>, vector<4x288xf32>, vector<4x288xf32> -> vector<4x288xf32>
    %24 = arith.addf %18, %23 : vector<4x288xf32>
    %c4 = arith.constant 4 : index
    %c0_23 = arith.constant 0 : index
    %c0_24 = arith.constant 0 : index
    %25 = vector.load %arg2[%c4, %c0_23, %c0_24] : memref<9x4x4xf32, #tpu.memory_space<vmem>>, vector<1x4x4xf32>
    %26 = vector.shape_cast %25 : vector<1x4x4xf32> to vector<4x4xf32>
    %c0_25 = arith.constant 0 : index
    %c0_26 = arith.constant 0 : index
    %c19 = arith.constant 19 : index
    %27 = vector.load %arg1[%c0_25, %c0_26, %c19] : memref<1x4x342xf32, #tpu.memory_space<vmem>>, vector<1x4x288xf32>
    %28 = vector.shape_cast %27 : vector<1x4x288xf32> to vector<4x288xf32>
    %cst_27 = arith.constant dense<0.000000e+00> : vector<4x288xf32>
    %29 = tpu.matmul %26, %28, %cst_27 {dimension_numbers = #tpu.dot_dimension_numbers<[1], [0], [0], [1], [0, 0, 1, 1], [], []>} : vector<4x4xf32>, vector<4x288xf32>, vector<4x288xf32> -> vector<4x288xf32>
    %30 = arith.addf %24, %29 : vector<4x288xf32>
    %c5 = arith.constant 5 : index
    %c0_28 = arith.constant 0 : index
    %c0_29 = arith.constant 0 : index
    %31 = vector.load %arg2[%c5, %c0_28, %c0_29] : memref<9x4x4xf32, #tpu.memory_space<vmem>>, vector<1x4x4xf32>
    %32 = vector.shape_cast %31 : vector<1x4x4xf32> to vector<4x4xf32>
    %c0_30 = arith.constant 0 : index
    %c0_31 = arith.constant 0 : index
    %c20 = arith.constant 20 : index
    %33 = vector.load %arg1[%c0_30, %c0_31, %c20] : memref<1x4x342xf32, #tpu.memory_space<vmem>>, vector<1x4x288xf32>
    %34 = vector.shape_cast %33 : vector<1x4x288xf32> to vector<4x288xf32>
    %cst_32 = arith.constant dense<0.000000e+00> : vector<4x288xf32>
    %35 = tpu.matmul %32, %34, %cst_32 {dimension_numbers = #tpu.dot_dimension_numbers<[1], [0], [0], [1], [0, 0, 1, 1], [], []>} : vector<4x4xf32>, vector<4x288xf32>, vector<4x288xf32> -> vector<4x288xf32>
    %36 = arith.addf %30, %35 : vector<4x288xf32>
    %c6 = arith.constant 6 : index
    %c0_33 = arith.constant 0 : index
    %c0_34 = arith.constant 0 : index
    %37 = vector.load %arg2[%c6, %c0_33, %c0_34] : memref<9x4x4xf32, #tpu.memory_space<vmem>>, vector<1x4x4xf32>
    %38 = vector.shape_cast %37 : vector<1x4x4xf32> to vector<4x4xf32>
    %c0_35 = arith.constant 0 : index
    %c0_36 = arith.constant 0 : index
    %c36 = arith.constant 36 : index
    %39 = vector.load %arg1[%c0_35, %c0_36, %c36] : memref<1x4x342xf32, #tpu.memory_space<vmem>>, vector<1x4x288xf32>
    %40 = vector.shape_cast %39 : vector<1x4x288xf32> to vector<4x288xf32>
    %cst_37 = arith.constant dense<0.000000e+00> : vector<4x288xf32>
    %41 = tpu.matmul %38, %40, %cst_37 {dimension_numbers = #tpu.dot_dimension_numbers<[1], [0], [0], [1], [0, 0, 1, 1], [], []>} : vector<4x4xf32>, vector<4x288xf32>, vector<4x288xf32> -> vector<4x288xf32>
    %42 = arith.addf %36, %41 : vector<4x288xf32>
    %c7 = arith.constant 7 : index
    %c0_38 = arith.constant 0 : index
    %c0_39 = arith.constant 0 : index
    %43 = vector.load %arg2[%c7, %c0_38, %c0_39] : memref<9x4x4xf32, #tpu.memory_space<vmem>>, vector<1x4x4xf32>
    %44 = vector.shape_cast %43 : vector<1x4x4xf32> to vector<4x4xf32>
    %c0_40 = arith.constant 0 : index
    %c0_41 = arith.constant 0 : index
    %c37 = arith.constant 37 : index
    %45 = vector.load %arg1[%c0_40, %c0_41, %c37] : memref<1x4x342xf32, #tpu.memory_space<vmem>>, vector<1x4x288xf32>
    %46 = vector.shape_cast %45 : vector<1x4x288xf32> to vector<4x288xf32>
    %cst_42 = arith.constant dense<0.000000e+00> : vector<4x288xf32>
    %47 = tpu.matmul %44, %46, %cst_42 {dimension_numbers = #tpu.dot_dimension_numbers<[1], [0], [0], [1], [0, 0, 1, 1], [], []>} : vector<4x4xf32>, vector<4x288xf32>, vector<4x288xf32> -> vector<4x288xf32>
    %48 = arith.addf %42, %47 : vector<4x288xf32>
    %c8 = arith.constant 8 : index
    %c0_43 = arith.constant 0 : index
    %c0_44 = arith.constant 0 : index
    %49 = vector.load %arg2[%c8, %c0_43, %c0_44] : memref<9x4x4xf32, #tpu.memory_space<vmem>>, vector<1x4x4xf32>
    %50 = vector.shape_cast %49 : vector<1x4x4xf32> to vector<4x4xf32>
    %c0_45 = arith.constant 0 : index
    %c0_46 = arith.constant 0 : index
    %c38 = arith.constant 38 : index
    %51 = vector.load %arg1[%c0_45, %c0_46, %c38] : memref<1x4x342xf32, #tpu.memory_space<vmem>>, vector<1x4x288xf32>
    %52 = vector.shape_cast %51 : vector<1x4x288xf32> to vector<4x288xf32>
    %cst_47 = arith.constant dense<0.000000e+00> : vector<4x288xf32>
    %53 = tpu.matmul %50, %52, %cst_47 {dimension_numbers = #tpu.dot_dimension_numbers<[1], [0], [0], [1], [0, 0, 1, 1], [], []>} : vector<4x4xf32>, vector<4x288xf32>, vector<4x288xf32> -> vector<4x288xf32>
    %54 = arith.addf %48, %53 : vector<4x288xf32>
    %c0_48 = arith.constant 0 : index
    %c0_49 = arith.constant 0 : index
    %55 = vector.load %arg3[%c0_48, %c0_49] : memref<1x288xf32, #tpu.memory_space<vmem>>, vector<1x288xf32>
    %56 = vector.broadcast %55 : vector<1x288xf32> to vector<4x288xf32>
    %57 = arith.mulf %54, %56 : vector<4x288xf32>
    %cst_50 = arith.constant dense<0.000000e+00> : vector<4xf32>
    %58 = vector.multi_reduction <add>, %57, %cst_50 [1] : vector<4x288xf32> to vector<4xf32>
    %59 = vector.shape_cast %58 : vector<4xf32> to vector<4x1xf32>
    %c0_51 = arith.constant 0 : index
    %c0_52 = arith.constant 0 : index
    %c0_53 = arith.constant 0 : index
    %60 = vector.load %arg4[%c0_51, %c0_52, %c0_53] : memref<1x4x1xf32, #tpu.memory_space<vmem>>, vector<1x4x1xf32>
    %61 = vector.shape_cast %60 : vector<1x4x1xf32> to vector<4x1xf32>
    %62 = vector.shape_cast %59 : vector<4x1xf32> to vector<1x4x1xf32>
    tpu.vector_store %arg4[%c0_51, %c0_52, %c0_53], %62 {strides = array<i32>} : memref<1x4x1xf32, #tpu.memory_space<vmem>>, vector<1x4x1xf32>,
    %63 = arith.mulf %57, %54 : vector<4x288xf32>
    %cst_54 = arith.constant dense<0.000000e+00> : vector<4xf32>
    %64 = vector.multi_reduction <add>, %63, %cst_54 [1] : vector<4x288xf32> to vector<4xf32>
    %65 = vector.shape_cast %64 : vector<4xf32> to vector<4x1xf32>
    %c0_55 = arith.constant 0 : index
    %c0_56 = arith.constant 0 : index
    %c0_57 = arith.constant 0 : index
    %66 = vector.load %arg5[%c0_55, %c0_56, %c0_57] : memref<1x4x1xf32, #tpu.memory_space<vmem>>, vector<1x4x1xf32>
    %67 = vector.shape_cast %66 : vector<1x4x1xf32> to vector<4x1xf32>
    %68 = vector.shape_cast %65 : vector<4x1xf32> to vector<1x4x1xf32>
    tpu.vector_store %arg5[%c0_55, %c0_56, %c0_57], %68 {strides = array<i32>} : memref<1x4x1xf32, #tpu.memory_space<vmem>>, vector<1x4x1xf32>,
    return
  }
  func.func @transform_0(%arg0: i32) -> (i32, i32, i32) {
    %c0_i32 = arith.constant 0 : i32
    %c0_i32_0 = arith.constant 0 : i32
    %c0_i32_1 = arith.constant 0 : i32
    return %arg0, %c0_i32, %c0_i32_0 : i32, i32, i32
  }
  func.func @transform_1(%arg0: i32) -> (i32, i32, i32) {
    %c0_i32 = arith.constant 0 : i32
    %c0_i32_0 = arith.constant 0 : i32
    %c0_i32_1 = arith.constant 0 : i32
    %c0_i32_2 = arith.constant 0 : i32
    return %c0_i32, %c0_i32_0, %c0_i32_1 : i32, i32, i32
  }
  func.func @transform_2(%arg0: i32) -> (i32, i32) {
    %c0_i32 = arith.constant 0 : i32
    %c0_i32_0 = arith.constant 0 : i32
    %c0_i32_1 = arith.constant 0 : i32
    return %c0_i32, %c0_i32_0 : i32, i32
  }
  func.func @transform_3(%arg0: i32) -> (i32, i32, i32) {
    %c0_i32 = arith.constant 0 : i32
    %c0_i32_0 = arith.constant 0 : i32
    %c0_i32_1 = arith.constant 0 : i32
    return %arg0, %c0_i32, %c0_i32_0 : i32, i32, i32
  }
  func.func @transform_4(%arg0: i32) -> (i32, i32, i32) {
    %c0_i32 = arith.constant 0 : i32
    %c0_i32_0 = arith.constant 0 : i32
    %c0_i32_1 = arith.constant 0 : i32
    return %arg0, %c0_i32, %c0_i32_0 : i32, i32, i32
  }
}

</mosaic_0001>

<llo_original>
// kernel: tpu_custom_call.1
$region0: #{tpu_custom_call.1}
  #allocation0 [shape = 'u32[]', space=smem, size = 0x4, offset = 0x4, fixed_abs, tag = 'smem constant byte address 0x4 - core index']
  #allocation1 [shape = 'u32[144,128]{1,0:T(1,128)}', space=vmem, size = 0x12000, scoped, tag = 'internal scratch']
  %s0 = inlined_call_operand.vmem [shape: f32[2,4,342], index: 0, kind: input, shape index: {}]
  %s1 = inlined_call_operand.vmem [shape: f32[9,4,4], index: 1, kind: input, shape index: {}]
  %s2 = inlined_call_operand.vmem [shape: f32[1,288], index: 2, kind: input, shape index: {}]
  %s3 = inlined_call_operand.vmem [shape: f32[2,4,1], index: 3, kind: output, shape index: {0}]
  %s4 = inlined_call_operand.vmem [shape: f32[2,4,1], index: 4, kind: output, shape index: {1}]
  %5 = xla_tuple %s3, %s4
  %s6 = sld [smem:[#allocation0]]
  $region53: #{tpu_custom_call.1} parent=0
    _
  %s8 = ssub.s32 1, %s6
  %s9 = scalar_select 0, %s8, %s6
  loop: start=0, step=1, limit=4
  $region2: #{tpu_custom_call.1} parent=0 // loop_pre_header
    _
  $region3: #{tpu_custom_call.1} parent=0 // loop_header
    %s11 = sphi 0, %s15
    %p12 = scmp.ge.s32.totalorder %s11, 4
    %s21 = sphi 0, %s23
    %s24 = sphi 0, %s21
    %s25 = sphi 0, %s24
    %s41 = sphi 0, %s25
    %s45 = sphi 0, %s45
    %s47 = sphi 0, %s45
    %s48 = sphi 0, %s47
    %s62 = sphi 0, %s48
    %s66 = sphi 0, %s66
    %s68 = sphi 0, %s66
    %s69 = sphi 0, %s68
    %s83 = sphi 0, %s69
    %s89 = sphi 0, %s91
    %s92 = sphi 0, %s89
    %s93 = sphi 0, %s92
    %s109 = sphi 0, %s93
    %s115 = sphi 0, %s117
    %s118 = sphi 0, %s115
    %s119 = sphi 0, %s118
    %s135 = sphi 0, %s119
  $region4: #{tpu_custom_call.1} parent=0 // loop_header_branch
    %14 = sbr.rel (%p12) target = $region8
  $region5: #{tpu_custom_call.1} parent=0 // loop_body
    %s16 = ssub.s32 %s11, 1
    %s17 = ssub.s32 %s11, 2
    %s18 = sadd.s32 %s11, 1
    %s19 = ssub.s32 %s11, %s18
    %p20 = scmp.eq.s32.totalorder %s19, 0
    %s22 = sadd.s32 %s21, 1
    %s23 = scalar_select %p20, %s21, %s22
    %p26 = pneg %p20
    %p27 = scmp.eq.s32.totalorder %s11, 1
    %p28 = por %p26, %p27
    %p29 = scmp.ne.s32.totalorder %s21, %s24
    %p30 = scmp.eq.s32.totalorder %s11, 0
    %p31 = por %p29, %p30
    %p32 = scmp.ne.s32.totalorder %s21, %s24
    %p33 = scmp.eq.s32.totalorder %s16, 1
    %p34 = por %p32, %p33
    %p35 = scmp.ne.s32.totalorder %s24, %s25
    %p36 = scmp.eq.s32.totalorder %s16, 0
    %p37 = por %p35, %p36
    %p38 = scmp.ne.s32.totalorder %s24, %s25
    %p39 = scmp.eq.s32.totalorder %s17, 1
    %p40 = por %p38, %p39
    %p42 = scmp.ne.s32.totalorder %s25, %s41
    %p43 = scmp.eq.s32.totalorder %s17, 0
    %p44 = por %p42, %p43
    %s46 = sadd.s32 %s45, 1
    %p49 = scmp.eq.s32.totalorder %s11, 1
    %p50 = scmp.ne.s32.totalorder %s45, %s47
    %p51 = scmp.eq.s32.totalorder %s11, 0
    %p52 = por %p50, %p51
    %p53 = scmp.ne.s32.totalorder %s45, %s47
    %p54 = scmp.eq.s32.totalorder %s16, 1
    %p55 = por %p53, %p54
    %p56 = scmp.ne.s32.totalorder %s47, %s48
    %p57 = scmp.eq.s32.totalorder %s16, 0
    %p58 = por %p56, %p57
    %p59 = scmp.ne.s32.totalorder %s47, %s48
    %p60 = scmp.eq.s32.totalorder %s17, 1
    %p61 = por %p59, %p60
    %p63 = scmp.ne.s32.totalorder %s48, %s62
    %p64 = scmp.eq.s32.totalorder %s17, 0
    %p65 = por %p63, %p64
    %s67 = sadd.s32 %s66, 1
    %p70 = scmp.eq.s32.totalorder %s11, 1
    %p71 = scmp.ne.s32.totalorder %s66, %s68
    %p72 = scmp.eq.s32.totalorder %s11, 0
    %p73 = por %p71, %p72
    %p74 = scmp.ne.s32.totalorder %s66, %s68
    %p75 = scmp.eq.s32.totalorder %s16, 1
    %p76 = por %p74, %p75
    %p77 = scmp.ne.s32.totalorder %s68, %s69
    %p78 = scmp.eq.s32.totalorder %s16, 0
    %p79 = por %p77, %p78
    %p80 = scmp.ne.s32.totalorder %s68, %s69
    %p81 = scmp.eq.s32.totalorder %s17, 1
    %p82 = por %p80, %p81
    %p84 = scmp.ne.s32.totalorder %s69, %s83
    %p85 = scmp.eq.s32.totalorder %s17, 0
    %p86 = por %p84, %p85
    %s87 = ssub.s32 %s11, %s18
    %p88 = scmp.eq.s32.totalorder %s87, 0
    %s90 = sadd.s32 %s89, 1
    %s91 = scalar_select %p88, %s89, %s90
    %p94 = pneg %p88
    %p95 = scmp.eq.s32.totalorder %s11, 1
    %p96 = por %p94, %p95
    %p97 = scmp.ne.s32.totalorder %s89, %s92
    %p98 = scmp.eq.s32.totalorder %s11, 0
    %p99 = por %p97, %p98
    %p100 = scmp.ne.s32.totalorder %s89, %s92
    %p101 = scmp.eq.s32.totalorder %s16, 1
    %p102 = por %p100, %p101
    %p103 = scmp.ne.s32.totalorder %s92, %s93
    %p104 = scmp.eq.s32.totalorder %s16, 0
    %p105 = por %p103, %p104
    %p106 = scmp.ne.s32.totalorder %s92, %s93
    %p107 = scmp.eq.s32.totalorder %s17, 1
    %p108 = por %p106, %p107
    %p110 = scmp.ne.s32.totalorder %s93, %s109
    %p111 = scmp.eq.s32.totalorder %s17, 0
    %p112 = por %p110, %p111
    %s113 = ssub.s32 %s11, %s18
    %p114 = scmp.eq.s32.totalorder %s113, 0
    %s116 = sadd.s32 %s115, 1
    %s117 = scalar_select %p114, %s115, %s116
    %p120 = pneg %p114
    %p121 = scmp.eq.s32.totalorder %s11, 1
    %p122 = por %p120, %p121
    %p123 = scmp.ne.s32.totalorder %s115, %s118
    %p124 = scmp.eq.s32.totalorder %s11, 0
    %p125 = por %p123, %p124
    %p126 = scmp.ne.s32.totalorder %s115, %s118
    %p127 = scmp.eq.s32.totalorder %s16, 1
    %p128 = por %p126, %p127
    %p129 = scmp.ne.s32.totalorder %s118, %s119
    %p130 = scmp.eq.s32.totalorder %s16, 0
    %p131 = por %p129, %p130
    %p132 = scmp.ne.s32.totalorder %s118, %s119
    %p133 = scmp.eq.s32.totalorder %s17, 1
    %p134 = por %p132, %p133
    %p136 = scmp.ne.s32.totalorder %s119, %s135
    %p137 = scmp.eq.s32.totalorder %s17, 0
    %p138 = por %p136, %p137
    %p139 = scmp.le.s32.totalorder 1, %s11
    %p140 = scmp.lt.s32.totalorder %s11, 3
    %p141 = pnand %p139, %p140
    %p142 = pneg %p141
    // Predicated region
    $region9: #{tpu_custom_call.1} parent=5 // pred_check
      _
    $region10: #{tpu_custom_call.1} parent=5 // pred_check_branch
      %144 = sbr.rel (%p141) target = $region12
    $region11: #{tpu_custom_call.1} parent=5 // pred_region
      %s145 = ssub.s32 %s11, 1
      // Predicated region
      $region13: #{tpu_custom_call.1} parent=11 // pred_check
        %p146 = pneg %p58
      $region14: #{tpu_custom_call.1} parent=11 // pred_check_branch
        %148 = sbr.rel (%p146) target = $region16
      $region15: #{tpu_custom_call.1} parent=11 // pred_region
        _
      $region16: #{tpu_custom_call.1} parent=11 // pred_fallthru
        _
      // Predicated region
      $region17: #{tpu_custom_call.1} parent=11 // pred_check
        %p149 = pneg %p79
      $region18: #{tpu_custom_call.1} parent=11 // pred_check_branch
        %151 = sbr.rel (%p149) target = $region20
      $region19: #{tpu_custom_call.1} parent=11 // pred_region
        _
      $region20: #{tpu_custom_call.1} parent=11 // pred_fallthru
        _
    $region12: #{tpu_custom_call.1} parent=5 // pred_fallthru
      _
    %p152 = scmp.lt.s32.totalorder %s11, 2
    // Predicated region
    $region21: #{tpu_custom_call.1} parent=5 // pred_check
      %p153 = pneg %p152
    $region22: #{tpu_custom_call.1} parent=5 // pred_check_branch
      %155 = sbr.rel (%p153) target = $region24
    $region23: #{tpu_custom_call.1} parent=5 // pred_region
      // Predicated region
      $region25: #{tpu_custom_call.1} parent=23 // pred_check
        %p156 = pneg %p31
      $region26: #{tpu_custom_call.1} parent=23 // pred_check_branch
        %158 = sbr.rel (%p156) target = $region28
      $region27: #{tpu_custom_call.1} parent=23 // pred_region
        %p159 = scmp.lt.s32.totalorder %s11, 1
        %s160 = scalar_select %p159, %s11, 1
        %s161 = smul.addr %s160, 3
        %s162 = smul.addr %s161, 4
        %s163 = scalar_lea.vmem %s0, %s162
      $region28: #{tpu_custom_call.1} parent=23 // pred_fallthru
        _
    $region24: #{tpu_custom_call.1} parent=5 // pred_fallthru
      _
    %p164 = scmp.le.s32.totalorder 1, %s11
    %p165 = scmp.lt.s32.totalorder %s11, 3
    %p166 = pnand %p164, %p165
    %p167 = pneg %p166
    // Predicated region
    $region29: #{tpu_custom_call.1} parent=5 // pred_check
      _
    $region30: #{tpu_custom_call.1} parent=5 // pred_check_branch
      %169 = sbr.rel (%p166) target = $region32
    $region31: #{tpu_custom_call.1} parent=5 // pred_region
      %s170 = ssub.s32 %s11, 1
      %p171 = scmp.lt.s32.totalorder %s16, 1
      %s172 = scalar_select %p171, %s16, 1
      %s173 = smul.addr %s172, 3
      %s174 = smul.addr %s173, 4
      %s175 = scalar_lea.vmem %s0, %s174
      %p176 = pneg %p37
      %p177 = pneg %p34
      %p178 = pneg %p58
      %p179 = pneg %p55
      %p180 = pneg %p79
      %p181 = pneg %p76
      %p182 = pneg %p105
      %p183 = pneg %p102
      %p184 = scmp.lt.s32.totalorder %s16, 1
      %s185 = scalar_select %p184, %s16, 1
      %s186 = smul.addr %s185, 4
      %s187 = scalar_lea.vmem %s3, %s186
      %p188 = pneg %p131
      %p189 = pneg %p128
      %p190 = scmp.lt.s32.totalorder %s16, 1
      %s191 = scalar_select %p190, %s16, 1
      %s192 = smul.addr %s191, 4
      %s193 = scalar_lea.vmem %s4, %s192
      %p194 = scmp.lt.s32.totalorder %s16, 1
      %s195 = scalar_select %p194, %s16, 1
      %s196 = smul.addr %s195, 3
      %s197 = smul.addr %s196, 4
      %s198 = scalar_lea.vmem %s0, %s197
      %p199 = scmp.lt.s32.totalorder %s16, 1
      %s200 = scalar_select %p199, %s16, 1
      %s201 = smul.addr %s200, 4
      %s202 = scalar_lea.vmem %s3, %s201
      %p203 = scmp.lt.s32.totalorder %s16, 1
      %s204 = scalar_select %p203, %s16, 1
      %s205 = smul.addr %s204, 4
      %s206 = scalar_lea.vmem %s4, %s205
      %v207 = vld [vmem:[%s1] sm:$0xf]
      %v208 = vld [vmem:[%s198] sm:$0xff]
      %v209 = vld [vmem:[%s198 + $0x8] sm:$0xf]
      %s210 = scalar_lea.vmem %s1, 4
      %v211 = vld [vmem:[%s210] sm:$0xf]
      %v214 = vcombine.high %v208, %v208
      %215 = vrot.lane.b32.xlu0 %v208, 127
      %v216 = vpop.permute.xlu0 %215
      %217 = vrot.lane.b32.xlu0 %v214, 127
      %v218 = vpop.permute.xlu0 %217
      %219 = vrot.lane.b32.xlu0 %v209, 127
      %v220 = vpop.permute.xlu0 %219
      %vm221 = vcmask 1039360
      %v222 = vsel %vm221, %v216, %v218
      %v223 = vsel %vm221, %v218, %v220
      %vm224 = vcmask 31744
      %v226 = vsel %vm224, %v211, 0
      %vm228 = vcmask 1043456
      %v229 = vsel %vm228, %v222, 0
      %v231 = vsel %vm228, %v223, 0
      %v233 = vsel %vm228, %v220, 0
      %235 = vmatprep.subr.mxu0 %v231
      %236 = vmatpush1.msra.mxu0 %v229
      %237 = vmatprep.subr.mxu0 0.0
      %238 = vmatpush1.msra.mxu0 0.0
      %239 = vmatprep.subr.mxu0 0.0
      %240 = vmatpush1.msra.mxu0 0.0
      %241 = vmatprep.subr.mxu0 0.0
      %242 = vmatpush1.msra.mxu0 0.0
      %243 = vmatprep.subr.mxu0 0.0
      %244 = vmatpush1.msra.mxu0 0.0
      %245 = vmatprep.subr.mxu0 0.0
      %246 = vmatpush1.msra.mxu0 0.0
      %247 = vmatprep.subr.mxu0 0.0
      %248 = vmatpush1.msra.mxu0 0.0
      %249 = vmatprep.subr.mxu0 0.0
      %250 = vmatpush1.msra.mxu0 0.0
      %251 = vmatprep.subr.mxu0 0.0
      %252 = vmatpush1.msra.mxu0 0.0
      %253 = vmatprep.subr.mxu0 0.0
      %254 = vmatpush1.msra.mxu0 0.0
      %255 = vmatprep.subr.mxu0 0.0
      %256 = vmatpush1.msra.mxu0 0.0
      %257 = vmatprep.subr.mxu0 0.0
      %258 = vmatpush1.msra.mxu0 0.0
      %259 = vmatprep.subr.mxu0 0.0
      %260 = vmatpush1.msra.mxu0 0.0
      %261 = vmatprep.subr.mxu0 0.0
      %262 = vmatpush1.msra.mxu0 0.0
      %263 = vmatprep.subr.mxu0 0.0
      %264 = vmatpush1.msra.mxu0 0.0
      %265 = vmatprep.subr.mxu0 0.0
      %266 = vmatpush1.msra.mxu0 0.0
      %267 = vmatprep.subr.mxu0 0.0
      %268 = vmatpush1.msra.mxu0 0.0
      %269 = vmatprep.subr.mxu0 0.0
      %270 = vmatpush1.msra.mxu0 0.0
      %271 = vmatprep.subr.mxu0 0.0
      %272 = vmatpush1.msra.mxu0 0.0
      %273 = vmatprep.subr.mxu0 0.0
      %274 = vmatpush1.msra.mxu0 0.0
      %275 = vmatprep.subr.mxu0 0.0
      %276 = vmatpush1.msra.mxu0 0.0
      %277 = vmatprep.subr.mxu0 0.0
      %278 = vmatpush1.msra.mxu0 0.0
      %279 = vmatprep.subr.mxu0 0.0
      %280 = vmatpush1.msra.mxu0 0.0
      %281 = vmatprep.subr.mxu0 0.0
      %282 = vmatpush1.msra.mxu0 0.0
      %283 = vmatprep.subr.mxu0 0.0
      %284 = vmatpush1.msra.mxu0 0.0
      %285 = vmatprep.subr.mxu0 0.0
      %286 = vmatpush1.msra.mxu0 0.0
      %287 = vmatprep.subr.mxu0 0.0
      %288 = vmatpush1.msra.mxu0 0.0
      %289 = vmatprep.subr.mxu0 0.0
      %290 = vmatpush1.msra.mxu0 0.0
      %291 = vmatprep.subr.mxu0 0.0
      %292 = vmatpush1.msra.mxu0 0.0
      %293 = vmatprep.subr.mxu0 0.0
      %294 = vmatpush1.msra.mxu0 0.0
      %295 = vmatprep.subr.mxu0 0.0
      %296 = vmatpush1.msra.mxu0 0.0
      %297 = vmatprep.subr.mxu0 0.0
      %298 = vmatpush1.msra.mxu0 0.0
      %299 = vmatprep.mubr.f32.mxu0 0.0
      %300 = vmatmul.mubr.f32.gmra.mrb[0].mxu0 %v226
      %v301 = vpop.f32.mrb[0].mxu0
      %v302 = vadd.f32 0.0, %v301
      %v303 = vpop.f32.mrb[0].mxu0
      %v304 = vadd.f32 0.0, %v303
      %305 = vdwg.mxu0
      %306 = vmatprep.subr.mxu0 0.0
      %307 = vmatpush1.msra.mxu0 %v233
      %308 = vmatprep.subr.mxu0 0.0
      %309 = vmatpush1.msra.mxu0 0.0
      %310 = vmatprep.subr.mxu0 0.0
      %311 = vmatpush1.msra.mxu0 0.0
      %312 = vmatprep.subr.mxu0 0.0
      %313 = vmatpush1.msra.mxu0 0.0
      %314 = vmatprep.subr.mxu0 0.0
      %315 = vmatpush1.msra.mxu0 0.0
      %316 = vmatprep.subr.mxu0 0.0
      %317 = vmatpush1.msra.mxu0 0.0
      %318 = vmatprep.subr.mxu0 0.0
      %319 = vmatpush1.msra.mxu0 0.0
      %320 = vmatprep.subr.mxu0 0.0
      %321 = vmatpush1.msra.mxu0 0.0
      %322 = vmatprep.subr.mxu0 0.0
      %323 = vmatpush1.msra.mxu0 0.0
      %324 = vmatprep.subr.mxu0 0.0
      %325 = vmatpush1.msra.mxu0 0.0
      %326 = vmatprep.subr.mxu0 0.0
      %327 = vmatpush1.msra.mxu0 0.0
      %328 = vmatprep.subr.mxu0 0.0
      %329 = vmatpush1.msra.mxu0 0.0
      %330 = vmatprep.subr.mxu0 0.0
      %331 = vmatpush1.msra.mxu0 0.0
      %332 = vmatprep.subr.mxu0 0.0
      %333 = vmatpush1.msra.mxu0 0.0
      %334 = vmatprep.subr.mxu0 0.0
      %335 = vmatpush1.msra.mxu0 0.0
      %336 = vmatprep.subr.mxu0 0.0
      %337 = vmatpush1.msra.mxu0 0.0
      %338 = vmatprep.subr.mxu0 0.0
      %339 = vmatpush1.msra.mxu0 0.0
      %340 = vmatprep.subr.mxu0 0.0
      %341 = vmatpush1.msra.mxu0 0.0
      %342 = vmatprep.subr.mxu0 0.0
      %343 = vmatpush1.msra.mxu0 0.0
      %344 = vmatprep.subr.mxu0 0.0
      %345 = vmatpush1.msra.mxu0 0.0
      %346 = vmatprep.subr.mxu0 0.0
      %347 = vmatpush1.msra.mxu0 0.0
      %348 = vmatprep.subr.mxu0 0.0
      %349 = vmatpush1.msra.mxu0 0.0
      %350 = vmatprep.subr.mxu0 0.0
      %351 = vmatpush1.msra.mxu0 0.0
      %352 = vmatprep.subr.mxu0 0.0
      %353 = vmatpush1.msra.mxu0 0.0
      %354 = vmatprep.subr.mxu0 0.0
      %355 = vmatpush1.msra.mxu0 0.0
      %356 = vmatprep.subr.mxu0 0.0
      %357 = vmatpush1.msra.mxu0 0.0
      %358 = vmatprep.subr.mxu0 0.0
      %359 = vmatpush1.msra.mxu0 0.0
      %360 = vmatprep.subr.mxu0 0.0
      %361 = vmatpush1.msra.mxu0 0.0
      %362 = vmatprep.subr.mxu0 0.0
      %363 = vmatpush1.msra.mxu0 0.0
      %364 = vmatprep.subr.mxu0 0.0
      %365 = vmatpush1.msra.mxu0 0.0
      %366 = vmatprep.subr.mxu0 0.0
      %367 = vmatpush1.msra.mxu0 0.0
      %368 = vmatprep.subr.mxu0 0.0
      %369 = vmatpush1.msra.mxu0 0.0
      %370 = vmatprep.mubr.f32.mxu0 0.0
      %371 = vmatmul.mubr.f32.gmra.mrb[0].mxu0 %v226
      %v372 = vpop.f32.mrb[0].mxu0
      %v373 = vadd.f32 0.0, %v372
      %v374 = vpop.f32.mrb[0].mxu0
      %375 = vdwg.mxu0
      %v377 = vsel %vm224, %v207, 0
      %v379 = vsel %vm228, %v208, 0
      %v381 = vsel %vm228, %v214, 0
      %v383 = vsel %vm228, %v209, 0
      %385 = vmatprep.subr.mxu0 %v381
      %386 = vmatpush1.msra.mxu0 %v379
      %387 = vmatprep.subr.mxu0 0.0
      %388 = vmatpush1.msra.mxu0 0.0
      %389 = vmatprep.subr.mxu0 0.0
      %390 = vmatpush1.msra.mxu0 0.0
      %391 = vmatprep.subr.mxu0 0.0
      %392 = vmatpush1.msra.mxu0 0.0
      %393 = vmatprep.subr.mxu0 0.0
      %394 = vmatpush1.msra.mxu0 0.0
      %395 = vmatprep.subr.mxu0 0.0
      %396 = vmatpush1.msra.mxu0 0.0
      %397 = vmatprep.subr.mxu0 0.0
      %398 = vmatpush1.msra.mxu0 0.0
      %399 = vmatprep.subr.mxu0 0.0
      %400 = vmatpush1.msra.mxu0 0.0
      %401 = vmatprep.subr.mxu0 0.0
      %402 = vmatpush1.msra.mxu0 0.0
      %403 = vmatprep.subr.mxu0 0.0
      %404 = vmatpush1.msra.mxu0 0.0
      %405 = vmatprep.subr.mxu0 0.0
      %406 = vmatpush1.msra.mxu0 0.0
      %407 = vmatprep.subr.mxu0 0.0
      %408 = vmatpush1.msra.mxu0 0.0
      %409 = vmatprep.subr.mxu0 0.0
      %410 = vmatpush1.msra.mxu0 0.0
      %411 = vmatprep.subr.mxu0 0.0
      %412 = vmatpush1.msra.mxu0 0.0
      %413 = vmatprep.subr.mxu0 0.0
      %414 = vmatpush1.msra.mxu0 0.0
      %415 = vmatprep.subr.mxu0 0.0
      %416 = vmatpush1.msra.mxu0 0.0
      %417 = vmatprep.subr.mxu0 0.0
      %418 = vmatpush1.msra.mxu0 0.0
      %419 = vmatprep.subr.mxu0 0.0
      %420 = vmatpush1.msra.mxu0 0.0
      %421 = vmatprep.subr.mxu0 0.0
      %422 = vmatpush1.msra.mxu0 0.0
      %423 = vmatprep.subr.mxu0 0.0
      %424 = vmatpush1.msra.mxu0 0.0
      %425 = vmatprep.subr.mxu0 0.0
      %426 = vmatpush1.msra.mxu0 0.0
      %427 = vmatprep.subr.mxu0 0.0
      %428 = vmatpush1.msra.mxu0 0.0
      %429 = vmatprep.subr.mxu0 0.0
      %430 = vmatpush1.msra.mxu0 0.0
      %431 = vmatprep.subr.mxu0 0.0
      %432 = vmatpush1.msra.mxu0 0.0
      %433 = vmatprep.subr.mxu0 0.0
      %434 = vmatpush1.msra.mxu0 0.0
      %435 = vmatprep.subr.mxu0 0.0
      %436 = vmatpush1.msra.mxu0 0.0
      %437 = vmatprep.subr.mxu0 0.0
      %438 = vmatpush1.msra.mxu0 0.0
      %439 = vmatprep.subr.mxu0 0.0
      %440 = vmatpush1.msra.mxu0 0.0
      %441 = vmatprep.subr.mxu0 0.0
      %442 = vmatpush1.msra.mxu0 0.0
      %443 = vmatprep.subr.mxu0 0.0
      %444 = vmatpush1.msra.mxu0 0.0
      %445 = vmatprep.subr.mxu0 0.0
      %446 = vmatpush1.msra.mxu0 0.0
      %447 = vmatprep.subr.mxu0 0.0
      %448 = vmatpush1.msra.mxu0 0.0
      %449 = vmatprep.mubr.f32.mxu0 0.0
      %450 = vmatmul.mubr.f32.gmra.mrb[0].mxu0 %v377
      %v451 = vpop.f32.mrb[0].mxu0
      %v452 = vadd.f32 %v302, %v451
      %v453 = vpop.f32.mrb[0].mxu0
      %v454 = vadd.f32 %v304, %v453
      %455 = vdwg.mxu0
      %456 = vmatprep.subr.mxu0 0.0
      %457 = vmatpush1.msra.mxu0 %v383
      %458 = vmatprep.subr.mxu0 0.0
      %459 = vmatpush1.msra.mxu0 0.0
      %460 = vmatprep.subr.mxu0 0.0
      %461 = vmatpush1.msra.mxu0 0.0
      %462 = vmatprep.subr.mxu0 0.0
      %463 = vmatpush1.msra.mxu0 0.0
      %464 = vmatprep.subr.mxu0 0.0
      %465 = vmatpush1.msra.mxu0 0.0
      %466 = vmatprep.subr.mxu0 0.0
      %467 = vmatpush1.msra.mxu0 0.0
      %468 = vmatprep.subr.mxu0 0.0
      %469 = vmatpush1.msra.mxu0 0.0
      %470 = vmatprep.subr.mxu0 0.0
      %471 = vmatpush1.msra.mxu0 0.0
      %472 = vmatprep.subr.mxu0 0.0
      %473 = vmatpush1.msra.mxu0 0.0
      %474 = vmatprep.subr.mxu0 0.0
      %475 = vmatpush1.msra.mxu0 0.0
      %476 = vmatprep.subr.mxu0 0.0
      %477 = vmatpush1.msra.mxu0 0.0
      %478 = vmatprep.subr.mxu0 0.0
      %479 = vmatpush1.msra.mxu0 0.0
      %480 = vmatprep.subr.mxu0 0.0
      %481 = vmatpush1.msra.mxu0 0.0
      %482 = vmatprep.subr.mxu0 0.0
      %483 = vmatpush1.msra.mxu0 0.0
      %484 = vmatprep.subr.mxu0 0.0
      %485 = vmatpush1.msra.mxu0 0.0
      %486 = vmatprep.subr.mxu0 0.0
      %487 = vmatpush1.msra.mxu0 0.0
      %488 = vmatprep.subr.mxu0 0.0
      %489 = vmatpush1.msra.mxu0 0.0
      %490 = vmatprep.subr.mxu0 0.0
      %491 = vmatpush1.msra.mxu0 0.0
      %492 = vmatprep.subr.mxu0 0.0
      %493 = vmatpush1.msra.mxu0 0.0
      %494 = vmatprep.subr.mxu0 0.0
      %495 = vmatpush1.msra.mxu0 0.0
      %496 = vmatprep.subr.mxu0 0.0
      %497 = vmatpush1.msra.mxu0 0.0
      %498 = vmatprep.subr.mxu0 0.0
      %499 = vmatpush1.msra.mxu0 0.0
      %500 = vmatprep.subr.mxu0 0.0
      %501 = vmatpush1.msra.mxu0 0.0
      %502 = vmatprep.subr.mxu0 0.0
      %503 = vmatpush1.msra.mxu0 0.0
      %504 = vmatprep.subr.mxu0 0.0
      %505 = vmatpush1.msra.mxu0 0.0
      %506 = vmatprep.subr.mxu0 0.0
      %507 = vmatpush1.msra.mxu0 0.0
      %508 = vmatprep.subr.mxu0 0.0
      %509 = vmatpush1.msra.mxu0 0.0
      %510 = vmatprep.subr.mxu0 0.0
      %511 = vmatpush1.msra.mxu0 0.0
      %512 = vmatprep.subr.mxu0 0.0
      %513 = vmatpush1.msra.mxu0 0.0
      %514 = vmatprep.subr.mxu0 0.0
      %515 = vmatpush1.msra.mxu0 0.0
      %516 = vmatprep.subr.mxu0 0.0
      %517 = vmatpush1.msra.mxu0 0.0
      %518 = vmatprep.subr.mxu0 0.0
      %519 = vmatpush1.msra.mxu0 0.0
      %520 = vmatprep.mubr.f32.mxu0 0.0
      %521 = vmatmul.mubr.f32.gmra.mrb[0].mxu0 %v377
      %v522 = vpop.f32.mrb[0].mxu0
      %v523 = vadd.f32 %v373, %v522
      %v524 = vpop.f32.mrb[0].mxu0
      %525 = vdwg.mxu0
      %s526 = scalar_lea.vmem %s1, 8
      %v527 = vld [vmem:[%s526] sm:$0xf]
      %v528 = vld [vmem:[%s198] sm:$0xff]
      %v529 = vld [vmem:[%s198 + $0x8] sm:$0xf]
      %v532 = vcombine.high %v528, %v528
      %533 = vrot.lane.b32.xlu0 %v528, 126
      %v534 = vpop.permute.xlu0 %533
      %535 = vrot.lane.b32.xlu0 %v532, 126
      %v536 = vpop.permute.xlu0 %535
      %537 = vrot.lane.b32.xlu0 %v529, 126
      %v538 = vpop.permute.xlu0 %537
      %vm539 = vcmask 1031168
      %v540 = vsel %vm539, %v534, %v536
      %v541 = vsel %vm539, %v536, %v538
      %v543 = vsel %vm224, %v527, 0
      %v545 = vsel %vm228, %v540, 0
      %v547 = vsel %vm228, %v541, 0
      %v549 = vsel %vm228, %v538, 0
      %551 = vmatprep.subr.mxu0 %v547
      %552 = vmatpush1.msra.mxu0 %v545
      %553 = vmatprep.subr.mxu0 0.0
      %554 = vmatpush1.msra.mxu0 0.0
      %555 = vmatprep.subr.mxu0 0.0
      %556 = vmatpush1.msra.mxu0 0.0
      %557 = vmatprep.subr.mxu0 0.0
      %558 = vmatpush1.msra.mxu0 0.0
      %559 = vmatprep.subr.mxu0 0.0
      %560 = vmatpush1.msra.mxu0 0.0
      %561 = vmatprep.subr.mxu0 0.0
      %562 = vmatpush1.msra.mxu0 0.0
      %563 = vmatprep.subr.mxu0 0.0
      %564 = vmatpush1.msra.mxu0 0.0
      %565 = vmatprep.subr.mxu0 0.0
      %566 = vmatpush1.msra.mxu0 0.0
      %567 = vmatprep.subr.mxu0 0.0
      %568 = vmatpush1.msra.mxu0 0.0
      %569 = vmatprep.subr.mxu0 0.0
      %570 = vmatpush1.msra.mxu0 0.0
      %571 = vmatprep.subr.mxu0 0.0
      %572 = vmatpush1.msra.mxu0 0.0
      %573 = vmatprep.subr.mxu0 0.0
      %574 = vmatpush1.msra.mxu0 0.0
      %575 = vmatprep.subr.mxu0 0.0
      %576 = vmatpush1.msra.mxu0 0.0
      %577 = vmatprep.subr.mxu0 0.0
      %578 = vmatpush1.msra.mxu0 0.0
      %579 = vmatprep.subr.mxu0 0.0
      %580 = vmatpush1.msra.mxu0 0.0
      %581 = vmatprep.subr.mxu0 0.0
      %582 = vmatpush1.msra.mxu0 0.0
      %583 = vmatprep.subr.mxu0 0.0
      %584 = vmatpush1.msra.mxu0 0.0
      %585 = vmatprep.subr.mxu0 0.0
      %586 = vmatpush1.msra.mxu0 0.0
      %587 = vmatprep.subr.mxu0 0.0
      %588 = vmatpush1.msra.mxu0 0.0
      %589 = vmatprep.subr.mxu0 0.0
      %590 = vmatpush1.msra.mxu0 0.0
      %591 = vmatprep.subr.mxu0 0.0
      %592 = vmatpush1.msra.mxu0 0.0
      %593 = vmatprep.subr.mxu0 0.0
      %594 = vmatpush1.msra.mxu0 0.0
      %595 = vmatprep.subr.mxu0 0.0
      %596 = vmatpush1.msra.mxu0 0.0
      %597 = vmatprep.subr.mxu0 0.0
      %598 = vmatpush1.msra.mxu0 0.0
      %599 = vmatprep.subr.mxu0 0.0
      %600 = vmatpush1.msra.mxu0 0.0
      %601 = vmatprep.subr.mxu0 0.0
      %602 = vmatpush1.msra.mxu0 0.0
      %603 = vmatprep.subr.mxu0 0.0
      %604 = vmatpush1.msra.mxu0 0.0
      %605 = vmatprep.subr.mxu0 0.0
      %606 = vmatpush1.msra.mxu0 0.0
      %607 = vmatprep.subr.mxu0 0.0
      %608 = vmatpush1.msra.mxu0 0.0
      %609 = vmatprep.subr.mxu0 0.0
      %610 = vmatpush1.msra.mxu0 0.0
      %611 = vmatprep.subr.mxu0 0.0
      %612 = vmatpush1.msra.mxu0 0.0
      %613 = vmatprep.subr.mxu0 0.0
      %614 = vmatpush1.msra.mxu0 0.0
      %615 = vmatprep.mubr.f32.mxu0 0.0
      %616 = vmatmul.mubr.f32.gmra.mrb[0].mxu0 %v543
      %v617 = vpop.f32.mrb[0].mxu0
      %v618 = vadd.f32 0.0, %v617
      %v619 = vpop.f32.mrb[0].mxu0
      %v620 = vadd.f32 0.0, %v619
      %621 = vdwg.mxu0
      %622 = vmatprep.subr.mxu0 0.0
      %623 = vmatpush1.msra.mxu0 %v549
      %624 = vmatprep.subr.mxu0 0.0
      %625 = vmatpush1.msra.mxu0 0.0
      %626 = vmatprep.subr.mxu0 0.0
      %627 = vmatpush1.msra.mxu0 0.0
      %628 = vmatprep.subr.mxu0 0.0
      %629 = vmatpush1.msra.mxu0 0.0
      %630 = vmatprep.subr.mxu0 0.0
      %631 = vmatpush1.msra.mxu0 0.0
      %632 = vmatprep.subr.mxu0 0.0
      %633 = vmatpush1.msra.mxu0 0.0
      %634 = vmatprep.subr.mxu0 0.0
      %635 = vmatpush1.msra.mxu0 0.0
      %636 = vmatprep.subr.mxu0 0.0
      %637 = vmatpush1.msra.mxu0 0.0
      %638 = vmatprep.subr.mxu0 0.0
      %639 = vmatpush1.msra.mxu0 0.0
      %640 = vmatprep.subr.mxu0 0.0
      %641 = vmatpush1.msra.mxu0 0.0
      %642 = vmatprep.subr.mxu0 0.0
      %643 = vmatpush1.msra.mxu0 0.0
      %644 = vmatprep.subr.mxu0 0.0
      %645 = vmatpush1.msra.mxu0 0.0
      %646 = vmatprep.subr.mxu0 0.0
      %647 = vmatpush1.msra.mxu0 0.0
      %648 = vmatprep.subr.mxu0 0.0
      %649 = vmatpush1.msra.mxu0 0.0
      %650 = vmatprep.subr.mxu0 0.0
      %651 = vmatpush1.msra.mxu0 0.0
      %652 = vmatprep.subr.mxu0 0.0
      %653 = vmatpush1.msra.mxu0 0.0
      %654 = vmatprep.subr.mxu0 0.0
      %655 = vmatpush1.msra.mxu0 0.0
      %656 = vmatprep.subr.mxu0 0.0
      %657 = vmatpush1.msra.mxu0 0.0
      %658 = vmatprep.subr.mxu0 0.0
      %659 = vmatpush1.msra.mxu0 0.0
      %660 = vmatprep.subr.mxu0 0.0
      %661 = vmatpush1.msra.mxu0 0.0
      %662 = vmatprep.subr.mxu0 0.0
      %663 = vmatpush1.msra.mxu0 0.0
      %664 = vmatprep.subr.mxu0 0.0
      %665 = vmatpush1.msra.mxu0 0.0
      %666 = vmatprep.subr.mxu0 0.0
      %667 = vmatpush1.msra.mxu0 0.0
      %668 = vmatprep.subr.mxu0 0.0
      %669 = vmatpush1.msra.mxu0 0.0
      %670 = vmatprep.subr.mxu0 0.0
      %671 = vmatpush1.msra.mxu0 0.0
      %672 = vmatprep.subr.mxu0 0.0
      %673 = vmatpush1.msra.mxu0 0.0
      %674 = vmatprep.subr.mxu0 0.0
      %675 = vmatpush1.msra.mxu0 0.0
      %676 = vmatprep.subr.mxu0 0.0
      %677 = vmatpush1.msra.mxu0 0.0
      %678 = vmatprep.subr.mxu0 0.0
      %679 = vmatpush1.msra.mxu0 0.0
      %680 = vmatprep.subr.mxu0 0.0
      %681 = vmatpush1.msra.mxu0 0.0
      %682 = vmatprep.subr.mxu0 0.0
      %683 = vmatpush1.msra.mxu0 0.0
      %684 = vmatprep.subr.mxu0 0.0
      %685 = vmatpush1.msra.mxu0 0.0
      %686 = vmatprep.mubr.f32.mxu0 0.0
      %687 = vmatmul.mubr.f32.gmra.mrb[0].mxu0 %v543
      %v688 = vpop.f32.mrb[0].mxu0
      %v689 = vadd.f32 0.0, %v688
      %v690 = vpop.f32.mrb[0].mxu0
      %691 = vdwg.mxu0
      %v692 = vadd.f32 %v452, %v618
      %v693 = vadd.f32 %v454, %v620
      %v694 = vadd.f32 %v523, %v689
      %s695 = scalar_lea.vmem %s1, 12
      %v696 = vld [vmem:[%s695] sm:$0xf]
      %v697 = vld [vmem:[%s198] sm:$0xff]
      %v698 = vld [vmem:[%s198 + $0x8] sm:$0xf]
      %v701 = vcombine.high %v697, %v697
      %702 = vrot.lane.b32.xlu0 %v697, 110
      %v703 = vpop.permute.xlu0 %702
      %704 = vrot.lane.b32.xlu0 %v701, 110
      %v705 = vpop.permute.xlu0 %704
      %706 = vrot.lane.b32.xlu0 %v698, 110
      %v707 = vpop.permute.xlu0 %706
      %vm708 = vcmask 900096
      %v709 = vsel %vm708, %v703, %v705
      %v710 = vsel %vm708, %v705, %v707
      %v712 = vsel %vm224, %v696, 0
      %v714 = vsel %vm228, %v709, 0
      %v716 = vsel %vm228, %v710, 0
      %v718 = vsel %vm228, %v707, 0
      %720 = vmatprep.subr.mxu0 %v716
      %721 = vmatpush1.msra.mxu0 %v714
      %722 = vmatprep.subr.mxu0 0.0
      %723 = vmatpush1.msra.mxu0 0.0
      %724 = vmatprep.subr.mxu0 0.0
      %725 = vmatpush1.msra.mxu0 0.0
      %726 = vmatprep.subr.mxu0 0.0
      %727 = vmatpush1.msra.mxu0 0.0
      %728 = vmatprep.subr.mxu0 0.0
      %729 = vmatpush1.msra.mxu0 0.0
      %730 = vmatprep.subr.mxu0 0.0
      %731 = vmatpush1.msra.mxu0 0.0
      %732 = vmatprep.subr.mxu0 0.0
      %733 = vmatpush1.msra.mxu0 0.0
      %734 = vmatprep.subr.mxu0 0.0
      %735 = vmatpush1.msra.mxu0 0.0
      %736 = vmatprep.subr.mxu0 0.0
      %737 = vmatpush1.msra.mxu0 0.0
      %738 = vmatprep.subr.mxu0 0.0
      %739 = vmatpush1.msra.mxu0 0.0
      %740 = vmatprep.subr.mxu0 0.0
      %741 = vmatpush1.msra.mxu0 0.0
      %742 = vmatprep.subr.mxu0 0.0
      %743 = vmatpush1.msra.mxu0 0.0
      %744 = vmatprep.subr.mxu0 0.0
      %745 = vmatpush1.msra.mxu0 0.0
      %746 = vmatprep.subr.mxu0 0.0
      %747 = vmatpush1.msra.mxu0 0.0
      %748 = vmatprep.subr.mxu0 0.0
      %749 = vmatpush1.msra.mxu0 0.0
      %750 = vmatprep.subr.mxu0 0.0
      %751 = vmatpush1.msra.mxu0 0.0
      %752 = vmatprep.subr.mxu0 0.0
      %753 = vmatpush1.msra.mxu0 0.0
      %754 = vmatprep.subr.mxu0 0.0
      %755 = vmatpush1.msra.mxu0 0.0
      %756 = vmatprep.subr.mxu0 0.0
      %757 = vmatpush1.msra.mxu0 0.0
      %758 = vmatprep.subr.mxu0 0.0
      %759 = vmatpush1.msra.mxu0 0.0
      %760 = vmatprep.subr.mxu0 0.0
      %761 = vmatpush1.msra.mxu0 0.0
      %762 = vmatprep.subr.mxu0 0.0
      %763 = vmatpush1.msra.mxu0 0.0
      %764 = vmatprep.subr.mxu0 0.0
      %765 = vmatpush1.msra.mxu0 0.0
      %766 = vmatprep.subr.mxu0 0.0
      %767 = vmatpush1.msra.mxu0 0.0
      %768 = vmatprep.subr.mxu0 0.0
      %769 = vmatpush1.msra.mxu0 0.0
      %770 = vmatprep.subr.mxu0 0.0
      %771 = vmatpush1.msra.mxu0 0.0
      %772 = vmatprep.subr.mxu0 0.0
      %773 = vmatpush1.msra.mxu0 0.0
      %774 = vmatprep.subr.mxu0 0.0
      %775 = vmatpush1.msra.mxu0 0.0
      %776 = vmatprep.subr.mxu0 0.0
      %777 = vmatpush1.msra.mxu0 0.0
      %778 = vmatprep.subr.mxu0 0.0
      %779 = vmatpush1.msra.mxu0 0.0
      %780 = vmatprep.subr.mxu0 0.0
      %781 = vmatpush1.msra.mxu0 0.0
      %782 = vmatprep.subr.mxu0 0.0
      %783 = vmatpush1.msra.mxu0 0.0
      %784 = vmatprep.mubr.f32.mxu0 0.0
      %785 = vmatmul.mubr.f32.gmra.mrb[0].mxu0 %v712
      %v786 = vpop.f32.mrb[0].mxu0
      %v787 = vadd.f32 0.0, %v786
      %v788 = vpop.f32.mrb[0].mxu0
      %v789 = vadd.f32 0.0, %v788
      %790 = vdwg.mxu0
      %791 = vmatprep.subr.mxu0 0.0
      %792 = vmatpush1.msra.mxu0 %v718
      %793 = vmatprep.subr.mxu0 0.0
      %794 = vmatpush1.msra.mxu0 0.0
      %795 = vmatprep.subr.mxu0 0.0
      %796 = vmatpush1.msra.mxu0 0.0
      %797 = vmatprep.subr.mxu0 0.0
      %798 = vmatpush1.msra.mxu0 0.0
      %799 = vmatprep.subr.mxu0 0.0
      %800 = vmatpush1.msra.mxu0 0.0
      %801 = vmatprep.subr.mxu0 0.0
      %802 = vmatpush1.msra.mxu0 0.0
      %803 = vmatprep.subr.mxu0 0.0
      %804 = vmatpush1.msra.mxu0 0.0
      %805 = vmatprep.subr.mxu0 0.0
      %806 = vmatpush1.msra.mxu0 0.0
      %807 = vmatprep.subr.mxu0 0.0
      %808 = vmatpush1.msra.mxu0 0.0
      %809 = vmatprep.subr.mxu0 0.0
      %810 = vmatpush1.msra.mxu0 0.0
      %811 = vmatprep.subr.mxu0 0.0
      %812 = vmatpush1.msra.mxu0 0.0
      %813 = vmatprep.subr.mxu0 0.0
      %814 = vmatpush1.msra.mxu0 0.0
      %815 = vmatprep.subr.mxu0 0.0
      %816 = vmatpush1.msra.mxu0 0.0
      %817 = vmatprep.subr.mxu0 0.0
      %818 = vmatpush1.msra.mxu0 0.0
      %819 = vmatprep.subr.mxu0 0.0
      %820 = vmatpush1.msra.mxu0 0.0
      %821 = vmatprep.subr.mxu0 0.0
      %822 = vmatpush1.msra.mxu0 0.0
      %823 = vmatprep.subr.mxu0 0.0
      %824 = vmatpush1.msra.mxu0 0.0
      %825 = vmatprep.subr.mxu0 0.0
      %826 = vmatpush1.msra.mxu0 0.0
      %827 = vmatprep.subr.mxu0 0.0
      %828 = vmatpush1.msra.mxu0 0.0
      %829 = vmatprep.subr.mxu0 0.0
      %830 = vmatpush1.msra.mxu0 0.0
      %831 = vmatprep.subr.mxu0 0.0
      %832 = vmatpush1.msra.mxu0 0.0
      %833 = vmatprep.subr.mxu0 0.0
      %834 = vmatpush1.msra.mxu0 0.0
      %835 = vmatprep.subr.mxu0 0.0
      %836 = vmatpush1.msra.mxu0 0.0
      %837 = vmatprep.subr.mxu0 0.0
      %838 = vmatpush1.msra.mxu0 0.0
      %839 = vmatprep.subr.mxu0 0.0
      %840 = vmatpush1.msra.mxu0 0.0
      %841 = vmatprep.subr.mxu0 0.0
      %842 = vmatpush1.msra.mxu0 0.0
      %843 = vmatprep.subr.mxu0 0.0
      %844 = vmatpush1.msra.mxu0 0.0
      %845 = vmatprep.subr.mxu0 0.0
      %846 = vmatpush1.msra.mxu0 0.0
      %847 = vmatprep.subr.mxu0 0.0
      %848 = vmatpush1.msra.mxu0 0.0
      %849 = vmatprep.subr.mxu0 0.0
      %850 = vmatpush1.msra.mxu0 0.0
      %851 = vmatprep.subr.mxu0 0.0
      %852 = vmatpush1.msra.mxu0 0.0
      %853 = vmatprep.subr.mxu0 0.0
      %854 = vmatpush1.msra.mxu0 0.0
      %855 = vmatprep.mubr.f32.mxu0 0.0
      %856 = vmatmul.mubr.f32.gmra.mrb[0].mxu0 %v712
      %v857 = vpop.f32.mrb[0].mxu0
      %v858 = vadd.f32 0.0, %v857
      %v859 = vpop.f32.mrb[0].mxu0
      %860 = vdwg.mxu0
      %v861 = vadd.f32 %v692, %v787
      %v862 = vadd.f32 %v693, %v789
      %v863 = vadd.f32 %v694, %v858
      %s864 = scalar_lea.vmem %s1, 16
      %v865 = vld [vmem:[%s864] sm:$0xf]
      %v866 = vld [vmem:[%s198] sm:$0xff]
      %v867 = vld [vmem:[%s198 + $0x8] sm:$0xf]
      %v870 = vcombine.high %v866, %v866
      %871 = vrot.lane.b32.xlu0 %v866, 109
      %v872 = vpop.permute.xlu0 %871
      %873 = vrot.lane.b32.xlu0 %v870, 109
      %v874 = vpop.permute.xlu0 %873
      %875 = vrot.lane.b32.xlu0 %v867, 109
      %v876 = vpop.permute.xlu0 %875
      %vm877 = vcmask 891904
      %v878 = vsel %vm877, %v872, %v874
      %v879 = vsel %vm877, %v874, %v876
      %v881 = vsel %vm224, %v865, 0
      %v883 = vsel %vm228, %v878, 0
      %v885 = vsel %vm228, %v879, 0
      %v887 = vsel %vm228, %v876, 0
      %889 = vmatprep.subr.mxu0 %v885
      %890 = vmatpush1.msra.mxu0 %v883
      %891 = vmatprep.subr.mxu0 0.0
      %892 = vmatpush1.msra.mxu0 0.0
      %893 = vmatprep.subr.mxu0 0.0
      %894 = vmatpush1.msra.mxu0 0.0
      %895 = vmatprep.subr.mxu0 0.0
      %896 = vmatpush1.msra.mxu0 0.0
      %897 = vmatprep.subr.mxu0 0.0
      %898 = vmatpush1.msra.mxu0 0.0
      %899 = vmatprep.subr.mxu0 0.0
      %900 = vmatpush1.msra.mxu0 0.0
      %901 = vmatprep.subr.mxu0 0.0
      %902 = vmatpush1.msra.mxu0 0.0
      %903 = vmatprep.subr.mxu0 0.0
      %904 = vmatpush1.msra.mxu0 0.0
      %905 = vmatprep.subr.mxu0 0.0
      %906 = vmatpush1.msra.mxu0 0.0
      %907 = vmatprep.subr.mxu0 0.0
      %908 = vmatpush1.msra.mxu0 0.0
      %909 = vmatprep.subr.mxu0 0.0
      %910 = vmatpush1.msra.mxu0 0.0
      %911 = vmatprep.subr.mxu0 0.0
      %912 = vmatpush1.msra.mxu0 0.0
      %913 = vmatprep.subr.mxu0 0.0
      %914 = vmatpush1.msra.mxu0 0.0
      %915 = vmatprep.subr.mxu0 0.0
      %916 = vmatpush1.msra.mxu0 0.0
      %917 = vmatprep.subr.mxu0 0.0
      %918 = vmatpush1.msra.mxu0 0.0
      %919 = vmatprep.subr.mxu0 0.0
      %920 = vmatpush1.msra.mxu0 0.0
      %921 = vmatprep.subr.mxu0 0.0
      %922 = vmatpush1.msra.mxu0 0.0
      %923 = vmatprep.subr.mxu0 0.0
      %924 = vmatpush1.msra.mxu0 0.0
      %925 = vmatprep.subr.mxu0 0.0
      %926 = vmatpush1.msra.mxu0 0.0
      %927 = vmatprep.subr.mxu0 0.0
      %928 = vmatpush1.msra.mxu0 0.0
      %929 = vmatprep.subr.mxu0 0.0
      %930 = vmatpush1.msra.mxu0 0.0
      %931 = vmatprep.subr.mxu0 0.0
      %932 = vmatpush1.msra.mxu0 0.0
      %933 = vmatprep.subr.mxu0 0.0
      %934 = vmatpush1.msra.mxu0 0.0
      %935 = vmatprep.subr.mxu0 0.0
      %936 = vmatpush1.msra.mxu0 0.0
      %937 = vmatprep.subr.mxu0 0.0
      %938 = vmatpush1.msra.mxu0 0.0
      %939 = vmatprep.subr.mxu0 0.0
      %940 = vmatpush1.msra.mxu0 0.0
      %941 = vmatprep.subr.mxu0 0.0
      %942 = vmatpush1.msra.mxu0 0.0
      %943 = vmatprep.subr.mxu0 0.0
      %944 = vmatpush1.msra.mxu0 0.0
      %945 = vmatprep.subr.mxu0 0.0
      %946 = vmatpush1.msra.mxu0 0.0
      %947 = vmatprep.subr.mxu0 0.0
      %948 = vmatpush1.msra.mxu0 0.0
      %949 = vmatprep.subr.mxu0 0.0
      %950 = vmatpush1.msra.mxu0 0.0
      %951 = vmatprep.subr.mxu0 0.0
      %952 = vmatpush1.msra.mxu0 0.0
      %953 = vmatprep.mubr.f32.mxu0 0.0
      %954 = vmatmul.mubr.f32.gmra.mrb[0].mxu0 %v881
      %v955 = vpop.f32.mrb[0].mxu0
      %v956 = vadd.f32 0.0, %v955
      %v957 = vpop.f32.mrb[0].mxu0
      %v958 = vadd.f32 0.0, %v957
      %959 = vdwg.mxu0
      %960 = vmatprep.subr.mxu0 0.0
      %961 = vmatpush1.msra.mxu0 %v887
      %962 = vmatprep.subr.mxu0 0.0
      %963 = vmatpush1.msra.mxu0 0.0
      %964 = vmatprep.subr.mxu0 0.0
      %965 = vmatpush1.msra.mxu0 0.0
      %966 = vmatprep.subr.mxu0 0.0
      %967 = vmatpush1.msra.mxu0 0.0
      %968 = vmatprep.subr.mxu0 0.0
      %969 = vmatpush1.msra.mxu0 0.0
      %970 = vmatprep.subr.mxu0 0.0
      %971 = vmatpush1.msra.mxu0 0.0
      %972 = vmatprep.subr.mxu0 0.0
      %973 = vmatpush1.msra.mxu0 0.0
      %974 = vmatprep.subr.mxu0 0.0
      %975 = vmatpush1.msra.mxu0 0.0
      %976 = vmatprep.subr.mxu0 0.0
      %977 = vmatpush1.msra.mxu0 0.0
      %978 = vmatprep.subr.mxu0 0.0
      %979 = vmatpush1.msra.mxu0 0.0
      %980 = vmatprep.subr.mxu0 0.0
      %981 = vmatpush1.msra.mxu0 0.0
      %982 = vmatprep.subr.mxu0 0.0
      %983 = vmatpush1.msra.mxu0 0.0
      %984 = vmatprep.subr.mxu0 0.0
      %985 = vmatpush1.msra.mxu0 0.0
      %986 = vmatprep.subr.mxu0 0.0
      %987 = vmatpush1.msra.mxu0 0.0
      %988 = vmatprep.subr.mxu0 0.0
      %989 = vmatpush1.msra.mxu0 0.0
      %990 = vmatprep.subr.mxu0 0.0
      %991 = vmatpush1.msra.mxu0 0.0
      %992 = vmatprep.subr.mxu0 0.0
      %993 = vmatpush1.msra.mxu0 0.0
      %994 = vmatprep.subr.mxu0 0.0
      %995 = vmatpush1.msra.mxu0 0.0
      %996 = vmatprep.subr.mxu0 0.0
      %997 = vmatpush1.msra.mxu0 0.0
      %998 = vmatprep.subr.mxu0 0.0
      %999 = vmatpush1.msra.mxu0 0.0
      %1000 = vmatprep.subr.mxu0 0.0
      %1001 = vmatpush1.msra.mxu0 0.0
      %1002 = vmatprep.subr.mxu0 0.0
      %1003 = vmatpush1.msra.mxu0 0.0
      %1004 = vmatprep.subr.mxu0 0.0
      %1005 = vmatpush1.msra.mxu0 0.0
      %1006 = vmatprep.subr.mxu0 0.0
      %1007 = vmatpush1.msra.mxu0 0.0
      %1008 = vmatprep.subr.mxu0 0.0
      %1009 = vmatpush1.msra.mxu0 0.0
      %1010 = vmatprep.subr.mxu0 0.0
      %1011 = vmatpush1.msra.mxu0 0.0
      %1012 = vmatprep.subr.mxu0 0.0
      %1013 = vmatpush1.msra.mxu0 0.0
      %1014 = vmatprep.subr.mxu0 0.0
      %1015 = vmatpush1.msra.mxu0 0.0
      %1016 = vmatprep.subr.mxu0 0.0
      %1017 = vmatpush1.msra.mxu0 0.0
      %1018 = vmatprep.subr.mxu0 0.0
      %1019 = vmatpush1.msra.mxu0 0.0
      %1020 = vmatprep.subr.mxu0 0.0
      %1021 = vmatpush1.msra.mxu0 0.0
      %1022 = vmatprep.subr.mxu0 0.0
      %1023 = vmatpush1.msra.mxu0 0.0
      %1024 = vmatprep.mubr.f32.mxu0 0.0
      %1025 = vmatmul.mubr.f32.gmra.mrb[0].mxu0 %v881
      %v1026 = vpop.f32.mrb[0].mxu0
      %v1027 = vadd.f32 0.0, %v1026
      %v1028 = vpop.f32.mrb[0].mxu0
      %1029 = vdwg.mxu0
      %v1030 = vadd.f32 %v861, %v956
      %v1031 = vadd.f32 %v862, %v958
      %v1032 = vadd.f32 %v863, %v1027
      %s1033 = scalar_lea.vmem %s1, 20
      %v1034 = vld [vmem:[%s1033] sm:$0xf]
      %v1035 = vld [vmem:[%s198] sm:$0xff]
      %v1036 = vld [vmem:[%s198 + $0x8] sm:$0xf]
      %v1039 = vcombine.high %v1035, %v1035
      %1040 = vrot.lane.b32.xlu0 %v1035, 108
      %v1041 = vpop.permute.xlu0 %1040
      %1042 = vrot.lane.b32.xlu0 %v1039, 108
      %v1043 = vpop.permute.xlu0 %1042
      %1044 = vrot.lane.b32.xlu0 %v1036, 108
      %v1045 = vpop.permute.xlu0 %1044
      %vm1046 = vcmask 883712
      %v1047 = vsel %vm1046, %v1041, %v1043
      %v1048 = vsel %vm1046, %v1043, %v1045
      %v1050 = vsel %vm224, %v1034, 0
      %v1052 = vsel %vm228, %v1047, 0
      %v1054 = vsel %vm228, %v1048, 0
      %v1056 = vsel %vm228, %v1045, 0
      %1058 = vmatprep.subr.mxu0 %v1054
      %1059 = vmatpush1.msra.mxu0 %v1052
      %1060 = vmatprep.subr.mxu0 0.0
      %1061 = vmatpush1.msra.mxu0 0.0
      %1062 = vmatprep.subr.mxu0 0.0
      %1063 = vmatpush1.msra.mxu0 0.0
      %1064 = vmatprep.subr.mxu0 0.0
      %1065 = vmatpush1.msra.mxu0 0.0
      %1066 = vmatprep.subr.mxu0 0.0
      %1067 = vmatpush1.msra.mxu0 0.0
      %1068 = vmatprep.subr.mxu0 0.0
      %1069 = vmatpush1.msra.mxu0 0.0
      %1070 = vmatprep.subr.mxu0 0.0
      %1071 = vmatpush1.msra.mxu0 0.0
      %1072 = vmatprep.subr.mxu0 0.0
      %1073 = vmatpush1.msra.mxu0 0.0
      %1074 = vmatprep.subr.mxu0 0.0
      %1075 = vmatpush1.msra.mxu0 0.0
      %1076 = vmatprep.subr.mxu0 0.0
      %1077 = vmatpush1.msra.mxu0 0.0
      %1078 = vmatprep.subr.mxu0 0.0
      %1079 = vmatpush1.msra.mxu0 0.0
      %1080 = vmatprep.subr.mxu0 0.0
      %1081 = vmatpush1.msra.mxu0 0.0
      %1082 = vmatprep.subr.mxu0 0.0
      %1083 = vmatpush1.msra.mxu0 0.0
      %1084 = vmatprep.subr.mxu0 0.0
      %1085 = vmatpush1.msra.mxu0 0.0
      %1086 = vmatprep.subr.mxu0 0.0
      %1087 = vmatpush1.msra.mxu0 0.0
      %1088 = vmatprep.subr.mxu0 0.0
      %1089 = vmatpush1.msra.mxu0 0.0
      %1090 = vmatprep.subr.mxu0 0.0
      %1091 = vmatpush1.msra.mxu0 0.0
      %1092 = vmatprep.subr.mxu0 0.0
      %1093 = vmatpush1.msra.mxu0 0.0
      %1094 = vmatprep.subr.mxu0 0.0
      %1095 = vmatpush1.msra.mxu0 0.0
      %1096 = vmatprep.subr.mxu0 0.0
      %1097 = vmatpush1.msra.mxu0 0.0
      %1098 = vmatprep.subr.mxu0 0.0
      %1099 = vmatpush1.msra.mxu0 0.0
      %1100 = vmatprep.subr.mxu0 0.0
      %1101 = vmatpush1.msra.mxu0 0.0
      %1102 = vmatprep.subr.mxu0 0.0
      %1103 = vmatpush1.msra.mxu0 0.0
      %1104 = vmatprep.subr.mxu0 0.0
      %1105 = vmatpush1.msra.mxu0 0.0
      %1106 = vmatprep.subr.mxu0 0.0
      %1107 = vmatpush1.msra.mxu0 0.0
      %1108 = vmatprep.subr.mxu0 0.0
      %1109 = vmatpush1.msra.mxu0 0.0
      %1110 = vmatprep.subr.mxu0 0.0
      %1111 = vmatpush1.msra.mxu0 0.0
      %1112 = vmatprep.subr.mxu0 0.0
      %1113 = vmatpush1.msra.mxu0 0.0
      %1114 = vmatprep.subr.mxu0 0.0
      %1115 = vmatpush1.msra.mxu0 0.0
      %1116 = vmatprep.subr.mxu0 0.0
      %1117 = vmatpush1.msra.mxu0 0.0
      %1118 = vmatprep.subr.mxu0 0.0
      %1119 = vmatpush1.msra.mxu0 0.0
      %1120 = vmatprep.subr.mxu0 0.0
      %1121 = vmatpush1.msra.mxu0 0.0
      %1122 = vmatprep.mubr.f32.mxu0 0.0
      %1123 = vmatmul.mubr.f32.gmra.mrb[0].mxu0 %v1050
      %v1124 = vpop.f32.mrb[0].mxu0
      %v1125 = vadd.f32 0.0, %v1124
      %v1126 = vpop.f32.mrb[0].mxu0
      %v1127 = vadd.f32 0.0, %v1126
      %1128 = vdwg.mxu0
      %1129 = vmatprep.subr.mxu0 0.0
      %1130 = vmatpush1.msra.mxu0 %v1056
      %1131 = vmatprep.subr.mxu0 0.0
      %1132 = vmatpush1.msra.mxu0 0.0
      %1133 = vmatprep.subr.mxu0 0.0
      %1134 = vmatpush1.msra.mxu0 0.0
      %1135 = vmatprep.subr.mxu0 0.0
      %1136 = vmatpush1.msra.mxu0 0.0
      %1137 = vmatprep.subr.mxu0 0.0
      %1138 = vmatpush1.msra.mxu0 0.0
      %1139 = vmatprep.subr.mxu0 0.0
      %1140 = vmatpush1.msra.mxu0 0.0
      %1141 = vmatprep.subr.mxu0 0.0
      %1142 = vmatpush1.msra.mxu0 0.0
      %1143 = vmatprep.subr.mxu0 0.0
      %1144 = vmatpush1.msra.mxu0 0.0
      %1145 = vmatprep.subr.mxu0 0.0
      %1146 = vmatpush1.msra.mxu0 0.0
      %1147 = vmatprep.subr.mxu0 0.0
      %1148 = vmatpush1.msra.mxu0 0.0
      %1149 = vmatprep.subr.mxu0 0.0
      %1150 = vmatpush1.msra.mxu0 0.0
      %1151 = vmatprep.subr.mxu0 0.0
      %1152 = vmatpush1.msra.mxu0 0.0
      %1153 = vmatprep.subr.mxu0 0.0
      %1154 = vmatpush1.msra.mxu0 0.0
      %1155 = vmatprep.subr.mxu0 0.0
      %1156 = vmatpush1.msra.mxu0 0.0
      %1157 = vmatprep.subr.mxu0 0.0
      %1158 = vmatpush1.msra.mxu0 0.0
      %1159 = vmatprep.subr.mxu0 0.0
      %1160 = vmatpush1.msra.mxu0 0.0
      %1161 = vmatprep.subr.mxu0 0.0
      %1162 = vmatpush1.msra.mxu0 0.0
      %1163 = vmatprep.subr.mxu0 0.0
      %1164 = vmatpush1.msra.mxu0 0.0
      %1165 = vmatprep.subr.mxu0 0.0
      %1166 = vmatpush1.msra.mxu0 0.0
      %1167 = vmatprep.subr.mxu0 0.0
      %1168 = vmatpush1.msra.mxu0 0.0
      %1169 = vmatprep.subr.mxu0 0.0
      %1170 = vmatpush1.msra.mxu0 0.0
      %1171 = vmatprep.subr.mxu0 0.0
      %1172 = vmatpush1.msra.mxu0 0.0
      %1173 = vmatprep.subr.mxu0 0.0
      %1174 = vmatpush1.msra.mxu0 0.0
      %1175 = vmatprep.subr.mxu0 0.0
      %1176 = vmatpush1.msra.mxu0 0.0
      %1177 = vmatprep.subr.mxu0 0.0
      %1178 = vmatpush1.msra.mxu0 0.0
      %1179 = vmatprep.subr.mxu0 0.0
      %1180 = vmatpush1.msra.mxu0 0.0
      %1181 = vmatprep.subr.mxu0 0.0
      %1182 = vmatpush1.msra.mxu0 0.0
      %1183 = vmatprep.subr.mxu0 0.0
      %1184 = vmatpush1.msra.mxu0 0.0
      %1185 = vmatprep.subr.mxu0 0.0
      %1186 = vmatpush1.msra.mxu0 0.0
      %1187 = vmatprep.subr.mxu0 0.0
      %1188 = vmatpush1.msra.mxu0 0.0
      %1189 = vmatprep.subr.mxu0 0.0
      %1190 = vmatpush1.msra.mxu0 0.0
      %1191 = vmatprep.subr.mxu0 0.0
      %1192 = vmatpush1.msra.mxu0 0.0
      %1193 = vmatprep.mubr.f32.mxu0 0.0
      %1194 = vmatmul.mubr.f32.gmra.mrb[0].mxu0 %v1050
      %v1195 = vpop.f32.mrb[0].mxu0
      %v1196 = vadd.f32 0.0, %v1195
      %v1197 = vpop.f32.mrb[0].mxu0
      %1198 = vdwg.mxu0
      %v1199 = vadd.f32 %v1030, %v1125
      %v1200 = vadd.f32 %v1031, %v1127
      %v1201 = vadd.f32 %v1032, %v1196
      %s1202 = scalar_lea.vmem %s1, 24
      %v1203 = vld [vmem:[%s1202] sm:$0xf]
      %v1204 = vld [vmem:[%s198] sm:$0xff]
      %v1205 = vld [vmem:[%s198 + $0x8] sm:$0xf]
      %v1208 = vcombine.high %v1204, %v1204
      %1209 = vrot.lane.b32.xlu0 %v1204, 92
      %v1210 = vpop.permute.xlu0 %1209
      %1211 = vrot.lane.b32.xlu0 %v1208, 92
      %v1212 = vpop.permute.xlu0 %1211
      %1213 = vrot.lane.b32.xlu0 %v1205, 92
      %v1214 = vpop.permute.xlu0 %1213
      %vm1215 = vcmask 752640
      %v1216 = vsel %vm1215, %v1210, %v1212
      %v1217 = vsel %vm1215, %v1212, %v1214
      %v1219 = vsel %vm224, %v1203, 0
      %v1221 = vsel %vm228, %v1216, 0
      %v1223 = vsel %vm228, %v1217, 0
      %v1225 = vsel %vm228, %v1214, 0
      %1227 = vmatprep.subr.mxu0 %v1223
      %1228 = vmatpush1.msra.mxu0 %v1221
      %1229 = vmatprep.subr.mxu0 0.0
      %1230 = vmatpush1.msra.mxu0 0.0
      %1231 = vmatprep.subr.mxu0 0.0
      %1232 = vmatpush1.msra.mxu0 0.0
      %1233 = vmatprep.subr.mxu0 0.0
      %1234 = vmatpush1.msra.mxu0 0.0
      %1235 = vmatprep.subr.mxu0 0.0
      %1236 = vmatpush1.msra.mxu0 0.0
      %1237 = vmatprep.subr.mxu0 0.0
      %1238 = vmatpush1.msra.mxu0 0.0
      %1239 = vmatprep.subr.mxu0 0.0
      %1240 = vmatpush1.msra.mxu0 0.0
      %1241 = vmatprep.subr.mxu0 0.0
      %1242 = vmatpush1.msra.mxu0 0.0
      %1243 = vmatprep.subr.mxu0 0.0
      %1244 = vmatpush1.msra.mxu0 0.0
      %1245 = vmatprep.subr.mxu0 0.0
      %1246 = vmatpush1.msra.mxu0 0.0
      %1247 = vmatprep.subr.mxu0 0.0
      %1248 = vmatpush1.msra.mxu0 0.0
      %1249 = vmatprep.subr.mxu0 0.0
      %1250 = vmatpush1.msra.mxu0 0.0
      %1251 = vmatprep.subr.mxu0 0.0
      %1252 = vmatpush1.msra.mxu0 0.0
      %1253 = vmatprep.subr.mxu0 0.0
      %1254 = vmatpush1.msra.mxu0 0.0
      %1255 = vmatprep.subr.mxu0 0.0
      %1256 = vmatpush1.msra.mxu0 0.0
      %1257 = vmatprep.subr.mxu0 0.0
      %1258 = vmatpush1.msra.mxu0 0.0
      %1259 = vmatprep.subr.mxu0 0.0
      %1260 = vmatpush1.msra.mxu0 0.0
      %1261 = vmatprep.subr.mxu0 0.0
      %1262 = vmatpush1.msra.mxu0 0.0
      %1263 = vmatprep.subr.mxu0 0.0
      %1264 = vmatpush1.msra.mxu0 0.0
      %1265 = vmatprep.subr.mxu0 0.0
      %1266 = vmatpush1.msra.mxu0 0.0
      %1267 = vmatprep.subr.mxu0 0.0
      %1268 = vmatpush1.msra.mxu0 0.0
      %1269 = vmatprep.subr.mxu0 0.0
      %1270 = vmatpush1.msra.mxu0 0.0
      %1271 = vmatprep.subr.mxu0 0.0
      %1272 = vmatpush1.msra.mxu0 0.0
      %1273 = vmatprep.subr.mxu0 0.0
      %1274 = vmatpush1.msra.mxu0 0.0
      %1275 = vmatprep.subr.mxu0 0.0
      %1276 = vmatpush1.msra.mxu0 0.0
      %1277 = vmatprep.subr.mxu0 0.0
      %1278 = vmatpush1.msra.mxu0 0.0
      %1279 = vmatprep.subr.mxu0 0.0
      %1280 = vmatpush1.msra.mxu0 0.0
      %1281 = vmatprep.subr.mxu0 0.0
      %1282 = vmatpush1.msra.mxu0 0.0
      %1283 = vmatprep.subr.mxu0 0.0
      %1284 = vmatpush1.msra.mxu0 0.0
      %1285 = vmatprep.subr.mxu0 0.0
      %1286 = vmatpush1.msra.mxu0 0.0
      %1287 = vmatprep.subr.mxu0 0.0
      %1288 = vmatpush1.msra.mxu0 0.0
      %1289 = vmatprep.subr.mxu0 0.0
      %1290 = vmatpush1.msra.mxu0 0.0
      %1291 = vmatprep.mubr.f32.mxu0 0.0
      %1292 = vmatmul.mubr.f32.gmra.mrb[0].mxu0 %v1219
      %v1293 = vpop.f32.mrb[0].mxu0
      %v1294 = vadd.f32 0.0, %v1293
      %v1295 = vpop.f32.mrb[0].mxu0
      %v1296 = vadd.f32 0.0, %v1295
      %1297 = vdwg.mxu0
      %1298 = vmatprep.subr.mxu0 0.0
      %1299 = vmatpush1.msra.mxu0 %v1225
      %1300 = vmatprep.subr.mxu0 0.0
      %1301 = vmatpush1.msra.mxu0 0.0
      %1302 = vmatprep.subr.mxu0 0.0
      %1303 = vmatpush1.msra.mxu0 0.0
      %1304 = vmatprep.subr.mxu0 0.0
      %1305 = vmatpush1.msra.mxu0 0.0
      %1306 = vmatprep.subr.mxu0 0.0
      %1307 = vmatpush1.msra.mxu0 0.0
      %1308 = vmatprep.subr.mxu0 0.0
      %1309 = vmatpush1.msra.mxu0 0.0
      %1310 = vmatprep.subr.mxu0 0.0
      %1311 = vmatpush1.msra.mxu0 0.0
      %1312 = vmatprep.subr.mxu0 0.0
      %1313 = vmatpush1.msra.mxu0 0.0
      %1314 = vmatprep.subr.mxu0 0.0
      %1315 = vmatpush1.msra.mxu0 0.0
      %1316 = vmatprep.subr.mxu0 0.0
      %1317 = vmatpush1.msra.mxu0 0.0
      %1318 = vmatprep.subr.mxu0 0.0
      %1319 = vmatpush1.msra.mxu0 0.0
      %1320 = vmatprep.subr.mxu0 0.0
      %1321 = vmatpush1.msra.mxu0 0.0
      %1322 = vmatprep.subr.mxu0 0.0
      %1323 = vmatpush1.msra.mxu0 0.0
      %1324 = vmatprep.subr.mxu0 0.0
      %1325 = vmatpush1.msra.mxu0 0.0
      %1326 = vmatprep.subr.mxu0 0.0
      %1327 = vmatpush1.msra.mxu0 0.0
      %1328 = vmatprep.subr.mxu0 0.0
      %1329 = vmatpush1.msra.mxu0 0.0
      %1330 = vmatprep.subr.mxu0 0.0
      %1331 = vmatpush1.msra.mxu0 0.0
      %1332 = vmatprep.subr.mxu0 0.0
      %1333 = vmatpush1.msra.mxu0 0.0
      %1334 = vmatprep.subr.mxu0 0.0
      %1335 = vmatpush1.msra.mxu0 0.0
      %1336 = vmatprep.subr.mxu0 0.0
      %1337 = vmatpush1.msra.mxu0 0.0
      %1338 = vmatprep.subr.mxu0 0.0
      %1339 = vmatpush1.msra.mxu0 0.0
      %1340 = vmatprep.subr.mxu0 0.0
      %1341 = vmatpush1.msra.mxu0 0.0
      %1342 = vmatprep.subr.mxu0 0.0
      %1343 = vmatpush1.msra.mxu0 0.0
      %1344 = vmatprep.subr.mxu0 0.0
      %1345 = vmatpush1.msra.mxu0 0.0
      %1346 = vmatprep.subr.mxu0 0.0
      %1347 = vmatpush1.msra.mxu0 0.0
      %1348 = vmatprep.subr.mxu0 0.0
      %1349 = vmatpush1.msra.mxu0 0.0
      %1350 = vmatprep.subr.mxu0 0.0
      %1351 = vmatpush1.msra.mxu0 0.0
      %1352 = vmatprep.subr.mxu0 0.0
      %1353 = vmatpush1.msra.mxu0 0.0
      %1354 = vmatprep.subr.mxu0 0.0
      %1355 = vmatpush1.msra.mxu0 0.0
      %1356 = vmatprep.subr.mxu0 0.0
      %1357 = vmatpush1.msra.mxu0 0.0
      %1358 = vmatprep.subr.mxu0 0.0
      %1359 = vmatpush1.msra.mxu0 0.0
      %1360 = vmatprep.subr.mxu0 0.0
      %1361 = vmatpush1.msra.mxu0 0.0
      %1362 = vmatprep.mubr.f32.mxu0 0.0
      %1363 = vmatmul.mubr.f32.gmra.mrb[0].mxu0 %v1219
      %v1364 = vpop.f32.mrb[0].mxu0
      %v1365 = vadd.f32 0.0, %v1364
      %v1366 = vpop.f32.mrb[0].mxu0
      %1367 = vdwg.mxu0
      %v1368 = vadd.f32 %v1199, %v1294
      %v1369 = vadd.f32 %v1200, %v1296
      %v1370 = vadd.f32 %v1201, %v1365
      %s1371 = scalar_lea.vmem %s1, 28
      %v1372 = vld [vmem:[%s1371] sm:$0xf]
      %v1373 = vld [vmem:[%s198] sm:$0xff]
      %v1374 = vld [vmem:[%s198 + $0x8] sm:$0xf]
      %v1377 = vcombine.high %v1373, %v1373
      %1378 = vrot.lane.b32.xlu0 %v1373, 91
      %v1379 = vpop.permute.xlu0 %1378
      %1380 = vrot.lane.b32.xlu0 %v1377, 91
      %v1381 = vpop.permute.xlu0 %1380
      %1382 = vrot.lane.b32.xlu0 %v1374, 91
      %v1383 = vpop.permute.xlu0 %1382
      %vm1384 = vcmask 744448
      %v1385 = vsel %vm1384, %v1379, %v1381
      %v1386 = vsel %vm1384, %v1381, %v1383
      %v1388 = vsel %vm224, %v1372, 0
      %v1390 = vsel %vm228, %v1385, 0
      %v1392 = vsel %vm228, %v1386, 0
      %v1394 = vsel %vm228, %v1383, 0
      %1396 = vmatprep.subr.mxu0 %v1392
      %1397 = vmatpush1.msra.mxu0 %v1390
      %1398 = vmatprep.subr.mxu0 0.0
      %1399 = vmatpush1.msra.mxu0 0.0
      %1400 = vmatprep.subr.mxu0 0.0
      %1401 = vmatpush1.msra.mxu0 0.0
      %1402 = vmatprep.subr.mxu0 0.0
      %1403 = vmatpush1.msra.mxu0 0.0
      %1404 = vmatprep.subr.mxu0 0.0
      %1405 = vmatpush1.msra.mxu0 0.0
      %1406 = vmatprep.subr.mxu0 0.0
      %1407 = vmatpush1.msra.mxu0 0.0
      %1408 = vmatprep.subr.mxu0 0.0
      %1409 = vmatpush1.msra.mxu0 0.0
      %1410 = vmatprep.subr.mxu0 0.0
      %1411 = vmatpush1.msra.mxu0 0.0
      %1412 = vmatprep.subr.mxu0 0.0
      %1413 = vmatpush1.msra.mxu0 0.0
      %1414 = vmatprep.subr.mxu0 0.0
      %1415 = vmatpush1.msra.mxu0 0.0
      %1416 = vmatprep.subr.mxu0 0.0
      %1417 = vmatpush1.msra.mxu0 0.0
      %1418 = vmatprep.subr.mxu0 0.0
      %1419 = vmatpush1.msra.mxu0 0.0
      %1420 = vmatprep.subr.mxu0 0.0
      %1421 = vmatpush1.msra.mxu0 0.0
      %1422 = vmatprep.subr.mxu0 0.0
      %1423 = vmatpush1.msra.mxu0 0.0
      %1424 = vmatprep.subr.mxu0 0.0
      %1425 = vmatpush1.msra.mxu0 0.0
      %1426 = vmatprep.subr.mxu0 0.0
      %1427 = vmatpush1.msra.mxu0 0.0
      %1428 = vmatprep.subr.mxu0 0.0
      %1429 = vmatpush1.msra.mxu0 0.0
      %1430 = vmatprep.subr.mxu0 0.0
      %1431 = vmatpush1.msra.mxu0 0.0
      %1432 = vmatprep.subr.mxu0 0.0
      %1433 = vmatpush1.msra.mxu0 0.0
      %1434 = vmatprep.subr.mxu0 0.0
      %1435 = vmatpush1.msra.mxu0 0.0
      %1436 = vmatprep.subr.mxu0 0.0
      %1437 = vmatpush1.msra.mxu0 0.0
      %1438 = vmatprep.subr.mxu0 0.0
      %1439 = vmatpush1.msra.mxu0 0.0
      %1440 = vmatprep.subr.mxu0 0.0
      %1441 = vmatpush1.msra.mxu0 0.0
      %1442 = vmatprep.subr.mxu0 0.0
      %1443 = vmatpush1.msra.mxu0 0.0
      %1444 = vmatprep.subr.mxu0 0.0
      %1445 = vmatpush1.msra.mxu0 0.0
      %1446 = vmatprep.subr.mxu0 0.0
      %1447 = vmatpush1.msra.mxu0 0.0
      %1448 = vmatprep.subr.mxu0 0.0
      %1449 = vmatpush1.msra.mxu0 0.0
      %1450 = vmatprep.subr.mxu0 0.0
      %1451 = vmatpush1.msra.mxu0 0.0
      %1452 = vmatprep.subr.mxu0 0.0
      %1453 = vmatpush1.msra.mxu0 0.0
      %1454 = vmatprep.subr.mxu0 0.0
      %1455 = vmatpush1.msra.mxu0 0.0
      %1456 = vmatprep.subr.mxu0 0.0
      %1457 = vmatpush1.msra.mxu0 0.0
      %1458 = vmatprep.subr.mxu0 0.0
      %1459 = vmatpush1.msra.mxu0 0.0
      %1460 = vmatprep.mubr.f32.mxu0 0.0
      %1461 = vmatmul.mubr.f32.gmra.mrb[0].mxu0 %v1388
      %v1462 = vpop.f32.mrb[0].mxu0
      %v1463 = vadd.f32 0.0, %v1462
      %v1464 = vpop.f32.mrb[0].mxu0
      %v1465 = vadd.f32 0.0, %v1464
      %1466 = vdwg.mxu0
      %1467 = vmatprep.subr.mxu0 0.0
      %1468 = vmatpush1.msra.mxu0 %v1394
      %1469 = vmatprep.subr.mxu0 0.0
      %1470 = vmatpush1.msra.mxu0 0.0
      %1471 = vmatprep.subr.mxu0 0.0
      %1472 = vmatpush1.msra.mxu0 0.0
      %1473 = vmatprep.subr.mxu0 0.0
      %1474 = vmatpush1.msra.mxu0 0.0
      %1475 = vmatprep.subr.mxu0 0.0
      %1476 = vmatpush1.msra.mxu0 0.0
      %1477 = vmatprep.subr.mxu0 0.0
      %1478 = vmatpush1.msra.mxu0 0.0
      %1479 = vmatprep.subr.mxu0 0.0
      %1480 = vmatpush1.msra.mxu0 0.0
      %1481 = vmatprep.subr.mxu0 0.0
      %1482 = vmatpush1.msra.mxu0 0.0
      %1483 = vmatprep.subr.mxu0 0.0
      %1484 = vmatpush1.msra.mxu0 0.0
      %1485 = vmatprep.subr.mxu0 0.0
      %1486 = vmatpush1.msra.mxu0 0.0
      %1487 = vmatprep.subr.mxu0 0.0
      %1488 = vmatpush1.msra.mxu0 0.0
      %1489 = vmatprep.subr.mxu0 0.0
      %1490 = vmatpush1.msra.mxu0 0.0
      %1491 = vmatprep.subr.mxu0 0.0
      %1492 = vmatpush1.msra.mxu0 0.0
      %1493 = vmatprep.subr.mxu0 0.0
      %1494 = vmatpush1.msra.mxu0 0.0
      %1495 = vmatprep.subr.mxu0 0.0
      %1496 = vmatpush1.msra.mxu0 0.0
      %1497 = vmatprep.subr.mxu0 0.0
      %1498 = vmatpush1.msra.mxu0 0.0
      %1499 = vmatprep.subr.mxu0 0.0
      %1500 = vmatpush1.msra.mxu0 0.0
      %1501 = vmatprep.subr.mxu0 0.0
      %1502 = vmatpush1.msra.mxu0 0.0
      %1503 = vmatprep.subr.mxu0 0.0
      %1504 = vmatpush1.msra.mxu0 0.0
      %1505 = vmatprep.subr.mxu0 0.0
      %1506 = vmatpush1.msra.mxu0 0.0
      %1507 = vmatprep.subr.mxu0 0.0
      %1508 = vmatpush1.msra.mxu0 0.0
      %1509 = vmatprep.subr.mxu0 0.0
      %1510 = vmatpush1.msra.mxu0 0.0
      %1511 = vmatprep.subr.mxu0 0.0
      %1512 = vmatpush1.msra.mxu0 0.0
      %1513 = vmatprep.subr.mxu0 0.0
      %1514 = vmatpush1.msra.mxu0 0.0
      %1515 = vmatprep.subr.mxu0 0.0
      %1516 = vmatpush1.msra.mxu0 0.0
      %1517 = vmatprep.subr.mxu0 0.0
      %1518 = vmatpush1.msra.mxu0 0.0
      %1519 = vmatprep.subr.mxu0 0.0
      %1520 = vmatpush1.msra.mxu0 0.0
      %1521 = vmatprep.subr.mxu0 0.0
      %1522 = vmatpush1.msra.mxu0 0.0
      %1523 = vmatprep.subr.mxu0 0.0
      %1524 = vmatpush1.msra.mxu0 0.0
      %1525 = vmatprep.subr.mxu0 0.0
      %1526 = vmatpush1.msra.mxu0 0.0
      %1527 = vmatprep.subr.mxu0 0.0
      %1528 = vmatpush1.msra.mxu0 0.0
      %1529 = vmatprep.subr.mxu0 0.0
      %1530 = vmatpush1.msra.mxu0 0.0
      %1531 = vmatprep.mubr.f32.mxu0 0.0
      %1532 = vmatmul.mubr.f32.gmra.mrb[0].mxu0 %v1388
      %v1533 = vpop.f32.mrb[0].mxu0
      %v1534 = vadd.f32 0.0, %v1533
      %v1535 = vpop.f32.mrb[0].mxu0
      %1536 = vdwg.mxu0
      %v1537 = vadd.f32 %v1368, %v1463
      %v1538 = vadd.f32 %v1369, %v1465
      %v1539 = vadd.f32 %v1370, %v1534
      %s1540 = scalar_lea.vmem %s1, 32
      %v1541 = vld [vmem:[%s1540] sm:$0xf]
      %v1542 = vld [vmem:[%s198] sm:$0xff]
      %v1543 = vld [vmem:[%s198 + $0x8] sm:$0xf]
      %v1546 = vcombine.high %v1542, %v1542
      %1547 = vrot.lane.b32.xlu0 %v1542, 90
      %v1548 = vpop.permute.xlu0 %1547
      %1549 = vrot.lane.b32.xlu0 %v1546, 90
      %v1550 = vpop.permute.xlu0 %1549
      %1551 = vrot.lane.b32.xlu0 %v1543, 90
      %v1552 = vpop.permute.xlu0 %1551
      %vm1553 = vcmask 736256
      %v1554 = vsel %vm1553, %v1548, %v1550
      %v1555 = vsel %vm1553, %v1550, %v1552
      %v1557 = vsel %vm224, %v1541, 0
      %v1559 = vsel %vm228, %v1554, 0
      %v1561 = vsel %vm228, %v1555, 0
      %v1563 = vsel %vm228, %v1552, 0
      %1565 = vmatprep.subr.mxu0 %v1561
      %1566 = vmatpush1.msra.mxu0 %v1559
      %1567 = vmatprep.subr.mxu0 0.0
      %1568 = vmatpush1.msra.mxu0 0.0
      %1569 = vmatprep.subr.mxu0 0.0
      %1570 = vmatpush1.msra.mxu0 0.0
      %1571 = vmatprep.subr.mxu0 0.0
      %1572 = vmatpush1.msra.mxu0 0.0
      %1573 = vmatprep.subr.mxu0 0.0
      %1574 = vmatpush1.msra.mxu0 0.0
      %1575 = vmatprep.subr.mxu0 0.0
      %1576 = vmatpush1.msra.mxu0 0.0
      %1577 = vmatprep.subr.mxu0 0.0
      %1578 = vmatpush1.msra.mxu0 0.0
      %1579 = vmatprep.subr.mxu0 0.0
      %1580 = vmatpush1.msra.mxu0 0.0
      %1581 = vmatprep.subr.mxu0 0.0
      %1582 = vmatpush1.msra.mxu0 0.0
      %1583 = vmatprep.subr.mxu0 0.0
      %1584 = vmatpush1.msra.mxu0 0.0
      %1585 = vmatprep.subr.mxu0 0.0
      %1586 = vmatpush1.msra.mxu0 0.0
      %1587 = vmatprep.subr.mxu0 0.0
      %1588 = vmatpush1.msra.mxu0 0.0
      %1589 = vmatprep.subr.mxu0 0.0
      %1590 = vmatpush1.msra.mxu0 0.0
      %1591 = vmatprep.subr.mxu0 0.0
      %1592 = vmatpush1.msra.mxu0 0.0
      %1593 = vmatprep.subr.mxu0 0.0
      %1594 = vmatpush1.msra.mxu0 0.0
      %1595 = vmatprep.subr.mxu0 0.0
      %1596 = vmatpush1.msra.mxu0 0.0
      %1597 = vmatprep.subr.mxu0 0.0
      %1598 = vmatpush1.msra.mxu0 0.0
      %1599 = vmatprep.subr.mxu0 0.0
      %1600 = vmatpush1.msra.mxu0 0.0
      %1601 = vmatprep.subr.mxu0 0.0
      %1602 = vmatpush1.msra.mxu0 0.0
      %1603 = vmatprep.subr.mxu0 0.0
      %1604 = vmatpush1.msra.mxu0 0.0
      %1605 = vmatprep.subr.mxu0 0.0
      %1606 = vmatpush1.msra.mxu0 0.0
      %1607 = vmatprep.subr.mxu0 0.0
      %1608 = vmatpush1.msra.mxu0 0.0
      %1609 = vmatprep.subr.mxu0 0.0
      %1610 = vmatpush1.msra.mxu0 0.0
      %1611 = vmatprep.subr.mxu0 0.0
      %1612 = vmatpush1.msra.mxu0 0.0
      %1613 = vmatprep.subr.mxu0 0.0
      %1614 = vmatpush1.msra.mxu0 0.0
      %1615 = vmatprep.subr.mxu0 0.0
      %1616 = vmatpush1.msra.mxu0 0.0
      %1617 = vmatprep.subr.mxu0 0.0
      %1618 = vmatpush1.msra.mxu0 0.0
      %1619 = vmatprep.subr.mxu0 0.0
      %1620 = vmatpush1.msra.mxu0 0.0
      %1621 = vmatprep.subr.mxu0 0.0
      %1622 = vmatpush1.msra.mxu0 0.0
      %1623 = vmatprep.subr.mxu0 0.0
      %1624 = vmatpush1.msra.mxu0 0.0
      %1625 = vmatprep.subr.mxu0 0.0
      %1626 = vmatpush1.msra.mxu0 0.0
      %1627 = vmatprep.subr.mxu0 0.0
      %1628 = vmatpush1.msra.mxu0 0.0
      %1629 = vmatprep.mubr.f32.mxu0 0.0
      %1630 = vmatmul.mubr.f32.gmra.mrb[0].mxu0 %v1557
      %v1631 = vpop.f32.mrb[0].mxu0
      %v1632 = vadd.f32 0.0, %v1631
      %v1633 = vpop.f32.mrb[0].mxu0
      %v1634 = vadd.f32 0.0, %v1633
      %1635 = vdwg.mxu0
      %1636 = vmatprep.subr.mxu0 0.0
      %1637 = vmatpush1.msra.mxu0 %v1563
      %1638 = vmatprep.subr.mxu0 0.0
      %1639 = vmatpush1.msra.mxu0 0.0
      %1640 = vmatprep.subr.mxu0 0.0
      %1641 = vmatpush1.msra.mxu0 0.0
      %1642 = vmatprep.subr.mxu0 0.0
      %1643 = vmatpush1.msra.mxu0 0.0
      %1644 = vmatprep.subr.mxu0 0.0
      %1645 = vmatpush1.msra.mxu0 0.0
      %1646 = vmatprep.subr.mxu0 0.0
      %1647 = vmatpush1.msra.mxu0 0.0
      %1648 = vmatprep.subr.mxu0 0.0
      %1649 = vmatpush1.msra.mxu0 0.0
      %1650 = vmatprep.subr.mxu0 0.0
      %1651 = vmatpush1.msra.mxu0 0.0
      %1652 = vmatprep.subr.mxu0 0.0
      %1653 = vmatpush1.msra.mxu0 0.0
      %1654 = vmatprep.subr.mxu0 0.0
      %1655 = vmatpush1.msra.mxu0 0.0
      %1656 = vmatprep.subr.mxu0 0.0
      %1657 = vmatpush1.msra.mxu0 0.0
      %1658 = vmatprep.subr.mxu0 0.0
      %1659 = vmatpush1.msra.mxu0 0.0
      %1660 = vmatprep.subr.mxu0 0.0
      %1661 = vmatpush1.msra.mxu0 0.0
      %1662 = vmatprep.subr.mxu0 0.0
      %1663 = vmatpush1.msra.mxu0 0.0
      %1664 = vmatprep.subr.mxu0 0.0
      %1665 = vmatpush1.msra.mxu0 0.0
      %1666 = vmatprep.subr.mxu0 0.0
      %1667 = vmatpush1.msra.mxu0 0.0
      %1668 = vmatprep.subr.mxu0 0.0
      %1669 = vmatpush1.msra.mxu0 0.0
      %1670 = vmatprep.subr.mxu0 0.0
      %1671 = vmatpush1.msra.mxu0 0.0
      %1672 = vmatprep.subr.mxu0 0.0
      %1673 = vmatpush1.msra.mxu0 0.0
      %1674 = vmatprep.subr.mxu0 0.0
      %1675 = vmatpush1.msra.mxu0 0.0
      %1676 = vmatprep.subr.mxu0 0.0
      %1677 = vmatpush1.msra.mxu0 0.0
      %1678 = vmatprep.subr.mxu0 0.0
      %1679 = vmatpush1.msra.mxu0 0.0
      %1680 = vmatprep.subr.mxu0 0.0
      %1681 = vmatpush1.msra.mxu0 0.0
      %1682 = vmatprep.subr.mxu0 0.0
      %1683 = vmatpush1.msra.mxu0 0.0
      %1684 = vmatprep.subr.mxu0 0.0
      %1685 = vmatpush1.msra.mxu0 0.0
      %1686 = vmatprep.subr.mxu0 0.0
      %1687 = vmatpush1.msra.mxu0 0.0
      %1688 = vmatprep.subr.mxu0 0.0
      %1689 = vmatpush1.msra.mxu0 0.0
      %1690 = vmatprep.subr.mxu0 0.0
      %1691 = vmatpush1.msra.mxu0 0.0
      %1692 = vmatprep.subr.mxu0 0.0
      %1693 = vmatpush1.msra.mxu0 0.0
      %1694 = vmatprep.subr.mxu0 0.0
      %1695 = vmatpush1.msra.mxu0 0.0
      %1696 = vmatprep.subr.mxu0 0.0
      %1697 = vmatpush1.msra.mxu0 0.0
      %1698 = vmatprep.subr.mxu0 0.0
      %1699 = vmatpush1.msra.mxu0 0.0
      %1700 = vmatprep.mubr.f32.mxu0 0.0
      %1701 = vmatmul.mubr.f32.gmra.mrb[0].mxu0 %v1557
      %v1702 = vpop.f32.mrb[0].mxu0
      %v1703 = vadd.f32 0.0, %v1702
      %v1704 = vpop.f32.mrb[0].mxu0
      %1705 = vdwg.mxu0
      %v1706 = vadd.f32 %v1537, %v1632
      %v1707 = vadd.f32 %v1538, %v1634
      %v1708 = vadd.f32 %v1539, %v1703
      %v1709 = vld [vmem:[%s2] sm:$0x7]
      %v1711 = vlaneseq
      %v1712 = vshrl.u32 %v1711, 7
      %v1713 = vsub.s32 0, %v1712
      %v1714 = vrot.slane %v1709, %v1713
      %v1715 = vlaneseq
      %v1716 = vshrl.u32 %v1715, 7
      %v1717 = vsub.s32 1, %v1716
      %v1718 = vrot.slane %v1709, %v1717
      %v1719 = vlaneseq
      %v1720 = vshrl.u32 %v1719, 7
      %v1721 = vsub.s32 2, %v1720
      %v1722 = vrot.slane %v1709, %v1721
      %v1726 = vmul.f32 %v1706, %v1714
      %v1727 = vmul.f32 %v1707, %v1718
      %v1728 = vmul.f32 %v1708, %v1722
      %v1729 = vsel %vm228, %v1726, 0.0
      %v1730 = vsel %vm228, %v1727, 0.0
      %v1731 = vadd.f32 %v1729, %v1730
      %vm1732 = vcmask 257024
      %v1733 = vsel %vm1732, %v1728, 0.0
      %v1734 = vadd.f32 %v1731, %v1733
      %1735 = vadd.xlane.f32.xlu0 %v1734
      %v1736 = vpop.xlane.xlu0 %1735
      %vm1737 = vcmask 3072
      %1738 = vst.msk [vmem:[%s202] sm:$0xf] %vm1737, %v1736
      %v1739 = vmul.f32 %v1726, %v1706
      %v1740 = vmul.f32 %v1727, %v1707
      %v1741 = vmul.f32 %v1728, %v1708
      %v1742 = vsel %vm228, %v1739, 0.0
      %v1743 = vsel %vm228, %v1740, 0.0
      %v1744 = vadd.f32 %v1742, %v1743
      %v1745 = vsel %vm1732, %v1741, 0.0
      %v1746 = vadd.f32 %v1744, %v1745
      %1747 = vadd.xlane.f32.xlu0 %v1746
      %v1748 = vpop.xlane.xlu0 %1747
      %1749 = vst.msk [vmem:[%s206] sm:$0xf] %vm1737, %v1748
      %p1750 = scmp.lt.s32.totalorder %s16, 1
      %s1751 = scalar_select %p1750, %s16, 1
      %s1752 = smul.addr %s1751, 4
      %s1753 = scalar_lea.vmem %s3, %s1752
      %p1754 = scmp.lt.s32.totalorder %s16, 1
      %s1755 = scalar_select %p1754, %s16, 1
      %s1756 = smul.addr %s1755, 4
      %s1757 = scalar_lea.vmem %s4, %s1756
      // Predicated region
      $region33: #{tpu_custom_call.1} parent=31 // pred_check
        %p1758 = pneg %p102
      $region34: #{tpu_custom_call.1} parent=31 // pred_check_branch
        %1760 = sbr.rel (%p1758) target = $region36
      $region35: #{tpu_custom_call.1} parent=31 // pred_region
        _
      $region36: #{tpu_custom_call.1} parent=31 // pred_fallthru
        _
      // Predicated region
      $region37: #{tpu_custom_call.1} parent=31 // pred_check
        %p1761 = pneg %p128
      $region38: #{tpu_custom_call.1} parent=31 // pred_check_branch
        %1763 = sbr.rel (%p1761) target = $region40
      $region39: #{tpu_custom_call.1} parent=31 // pred_region
        _
      $region40: #{tpu_custom_call.1} parent=31 // pred_fallthru
        _
    $region32: #{tpu_custom_call.1} parent=5 // pred_fallthru
      _
    %p1764 = scmp.le.s32.totalorder 2, %s11
    // Predicated region
    $region41: #{tpu_custom_call.1} parent=5 // pred_check
      %p1765 = pneg %p1764
    $region42: #{tpu_custom_call.1} parent=5 // pred_check_branch
      %1767 = sbr.rel (%p1765) target = $region44
    $region43: #{tpu_custom_call.1} parent=5 // pred_region
      %s1768 = ssub.s32 %s11, 2
      // Predicated region
      $region45: #{tpu_custom_call.1} parent=43 // pred_check
        %p1769 = pneg %p108
      $region46: #{tpu_custom_call.1} parent=43 // pred_check_branch
        %1771 = sbr.rel (%p1769) target = $region48
      $region47: #{tpu_custom_call.1} parent=43 // pred_region
        %p1772 = scmp.lt.s32.totalorder %s17, 1
        %s1773 = scalar_select %p1772, %s17, 1
        %s1774 = smul.addr %s1773, 4
        %s1775 = scalar_lea.vmem %s3, %s1774
      $region48: #{tpu_custom_call.1} parent=43 // pred_fallthru
        _
      // Predicated region
      $region49: #{tpu_custom_call.1} parent=43 // pred_check
        %p1776 = pneg %p134
      $region50: #{tpu_custom_call.1} parent=43 // pred_check_branch
        %1778 = sbr.rel (%p1776) target = $region52
      $region51: #{tpu_custom_call.1} parent=43 // pred_region
        %p1779 = scmp.lt.s32.totalorder %s17, 1
        %s1780 = scalar_select %p1779, %s17, 1
        %s1781 = smul.addr %s1780, 4
        %s1782 = scalar_lea.vmem %s4, %s1781
      $region52: #{tpu_custom_call.1} parent=43 // pred_fallthru
        _
    $region44: #{tpu_custom_call.1} parent=5 // pred_fallthru
      _
  $region6: #{tpu_custom_call.1} parent=0 // loop_footer
    %s15 = sadd.s32 1, %s11
  $region7: #{tpu_custom_call.1} parent=0 // loop_footer_branch
    %10 = sbr.rel target = $region3
  $region8: #{tpu_custom_call.1} parent=0 // loop_exit
    _

</llo_original>
